<compile_context>
chip_gen: v6e
topology: v6e:2x2x1
jax: 0.10.0
libtpu: 0.0.40
codegen_flags: <defaults>
</compile_context>

<pallas_src>
import functools

import jax
import jax.numpy as jnp
import numpy as np
from jax import lax
from jax.experimental import pallas as pl
from jax.experimental.pallas import tpu as pltpu

EPS = 1e-5


# ----------------------------------------------------------------------------
# Fused Pallas kernel
# ----------------------------------------------------------------------------
def _convbn_branch(x_ref, pad_ref, w1_ref, s1_ref, b1_ref,
                   w3_ref, s3_ref, b3_ref, taps, hs, ws):
    """One ConvBN branch on a VMEM-resident (1, hs, ws, Cin) input block.

    Stage 1 (optional bottleneck): (hs*ws, Cin) @ (Cin, Cmid) + BN + ReLU.
    Stage 2 (3x3 conv): the intermediate is written (with a zero border) into a
    VMEM scratch; the conv is `len(taps)` shifted (hs*ws, Cmid) @ (Cmid, Nout)
    matmuls accumulated in f32 — no im2col, no HBM round trip.
    """
    c_in = x_ref.shape[-1]
    xv = x_ref[...].reshape(hs * ws, c_in)

    if w1_ref is not None:
        y = jnp.dot(xv.astype(jnp.bfloat16), w1_ref[...],
                    preferred_element_type=jnp.float32)
        y = jnp.maximum(y * s1_ref[...] + b1_ref[...], 0.0)
    else:  # no bottleneck: stage 1 is the identity
        y = xv
    c_mid = y.shape[-1]

    # Zero border of the scratch provides the conv's zero padding.
    pad_ref[...] = jnp.zeros_like(pad_ref)
    pad_ref[1:1 + hs, 1:1 + ws, :] = y.reshape(hs, ws, c_mid)

    n_out = w3_ref.shape[-1]
    acc = jnp.zeros((hs * ws, n_out), jnp.float32)
    for t, (r0, c0) in enumerate(taps):
        win = pad_ref[r0:r0 + hs, c0:c0 + ws, :].reshape(hs * ws, c_mid)
        acc = acc + jnp.dot(win.astype(jnp.bfloat16), w3_ref[t],
                            preferred_element_type=jnp.float32)
    return jnp.maximum(acc * s3_ref[...] + b3_ref[...], 0.0)


def _fused_kernel(x0_ref, x1_ref,
                  w1d_ref, s1d_ref, b1d_ref, w3d_ref, s3d_ref, b3d_ref,
                  w1n_ref, s1n_ref, b1n_ref, w3n_ref, s3n_ref, b3n_ref,
                  o_ref, pad_d_ref, pad_n_ref,
                  *, use_b1_d, use_b1_n, down_taps, normal_taps):
    _, ho, wo, _ = o_ref.shape

    down = _convbn_branch(x0_ref, pad_d_ref,
                          w1d_ref if use_b1_d else None, s1d_ref, b1d_ref,
                          w3d_ref, s3d_ref, b3d_ref, down_taps, ho, wo)
    normal = _convbn_branch(x1_ref, pad_n_ref,
                            w1n_ref if use_b1_n else None, s1n_ref, b1n_ref,
                            w3n_ref, s3n_ref, b3n_ref, normal_taps, ho, wo)

    # Fused channel concat -> single lane-dense store of the full output slab.
    x1v = x1_ref[...].reshape(ho * wo, x1_ref.shape[-1])
    fused = jnp.concatenate([x1v, down, normal], axis=-1)
    o_ref[...] = fused.reshape(o_ref.shape)


# ----------------------------------------------------------------------------
# Parameter folding / packing (pure layout glue; in a full model do this once
# at init, not per call)
# ----------------------------------------------------------------------------
def _pack_stage1(params, c_in, n_phase):
    """Fold the optional 1x1 bottleneck conv (+BN) into one matmul weight.

    For the stride-2 ("down") branch the input is space-to-depth packed into
    n_phase=4 channel groups, so the 1x1 weight becomes block-diagonal and the
    BN scale/bias are tiled per phase.
    """
    if "w1" in params:
        mat = jnp.transpose(params["w1"][:, :, 0, 0])     # (Cin, Cmid)
        scale, bias = params["scale1"], params["bias1"]
        if n_phase > 1:
            mat = jnp.kron(jnp.eye(n_phase, dtype=mat.dtype), mat)
            scale = jnp.tile(scale, n_phase)
            bias = jnp.tile(bias, n_phase)
        return mat.astype(jnp.bfloat16), scale[None, :], bias[None, :], True, mat.shape[-1]
    # No bottleneck: dummy (unused) refs; stage 1 is statically skipped in-kernel.
    dummy_w = jnp.zeros((1, 1), jnp.bfloat16)
    dummy = jnp.zeros((1, 1), jnp.float32)
    return dummy_w, dummy, dummy, False, n_phase * c_in


def _pack_3x3_stride1(w3):
    """(Nout, Cmid, 3, 3) -> stacked (9, Cmid, Nout) tap weights + window starts."""
    w3t = jnp.transpose(w3, (2, 3, 1, 0))                 # (3, 3, Cmid, Nout)
    taps = tuple((kh, kw) for kh in range(3) for kw in range(3))
    mats = jnp.stack([w3t[kh, kw] for kh, kw in taps], axis=0)
    return mats.astype(jnp.bfloat16), taps


def _pack_3x3_stride2(w3):
    """(Nout, Cmid, 3, 3) -> 4 phase-packed (4*Cmid, Nout) weights + window starts.

    With the input space-to-depth packed (phase = (row parity, col parity)), the
    stride-2 / pad-1 3x3 conv becomes 4 shifted stride-1 matmuls; shift (dr, dc)
    in {0,-1}^2 maps to window start (1+dr, 1+dc) in the zero-padded scratch.
    """
    n_out, c_mid = w3.shape[0], w3.shape[1]
    w3t = jnp.transpose(w3, (2, 3, 1, 0))                 # (3, 3, Cmid, Nout)
    shifts = ((0, 0), (0, -1), (-1, 0), (-1, -1))
    mats = []
    for dr, dc in shifts:
        mat = jnp.zeros((4 * c_mid, n_out), w3.dtype)
        for kh in range(3):
            for kw in range(3):
                if ((-1 if kh == 0 else 0), (-1 if kw == 0 else 0)) != (dr, dc):
                    continue
                phase = (0 if kh == 1 else 1) * 2 + (0 if kw == 1 else 1)
                mat = mat.at[phase * c_mid:(phase + 1) * c_mid, :].set(w3t[kh, kw])
        mats.append(mat)
    taps = tuple((1 + dr, 1 + dc) for dr, dc in shifts)
    return jnp.stack(mats, axis=0).astype(jnp.bfloat16), taps


def _replicated_spec(a):
    zeros = (0,) * a.ndim
    return pl.BlockSpec(a.shape, lambda i: zeros)


# ----------------------------------------------------------------------------
# Forward (NHWC end-to-end)
# ----------------------------------------------------------------------------
def conv_down_normal_forward_nhwc(x0, x1, params_down, params_normal):
    """ParallelModule pattern: two ConvBN branches applied "in parallel" to
    (x0 fine scale -> stride-2 down, x1 coarse scale -> stride-1 normal),
    then channel-concat with the pass-through x1.  One fused pallas_call."""
    n, h0, w0, c0 = x0.shape
    n1, h1, w1x, c1 = x1.shape
    assert n == n1 and (h0, w0) == (2 * h1, 2 * w1x), (x0.shape, x1.shape)
    ho, wo = h1, w1x

    # Space-to-depth on the fine-scale input: turns the stride-2 conv into
    # stride-1 shifted matmuls (no strided access / im2col anywhere).
    x0s = x0.reshape(n, ho, 2, wo, 2, c0).transpose(0, 1, 3, 2, 4, 5)
    x0s = x0s.reshape(n, ho, wo, 4 * c0)

    w1d, s1d, b1d, use_b1_d, cd = _pack_stage1(params_down, c0, n_phase=4)
    w1n, s1n, b1n, use_b1_n, cn = _pack_stage1(params_normal, c1, n_phase=1)
    w3d, down_taps = _pack_3x3_stride2(params_down["w3"])
    w3n, normal_taps = _pack_3x3_stride1(params_normal["w3"])
    s3d, b3d = params_down["scale3"][None, :], params_down["bias3"][None, :]
    s3n, b3n = params_normal["scale3"][None, :], params_normal["bias3"][None, :]
    no2_d, no2_n = params_down["w3"].shape[0], params_normal["w3"].shape[0]
    c_tot = c1 + no2_d + no2_n

    # One whole sample per grid step (largest useful tile at MSDNet sizes);
    # grid=(B,) "parallel" still gives >=2 independent steps for v7x's 2 TCs.
    est_bytes = 8 * ho * wo * (4 * c0 + c1 + c_tot + cd + cn + 4 * no2_d)
    assert est_bytes < 24 * 1024 * 1024, (
        "per-sample tile too large for VMEM; add a row grid axis")

    kernel = functools.partial(
        _fused_kernel, use_b1_d=use_b1_d, use_b1_n=use_b1_n,
        down_taps=down_taps, normal_taps=normal_taps)

    return pl.pallas_call(
        kernel,
        out_shape=jax.ShapeDtypeStruct((n, ho, wo, c_tot), jnp.float32),
        grid=(n,),
        in_specs=[
            pl.BlockSpec((1, ho, wo, 4 * c0), lambda i: (i, 0, 0, 0)),
            pl.BlockSpec((1, ho, wo, c1), lambda i: (i, 0, 0, 0)),
            _replicated_spec(w1d), _replicated_spec(s1d), _replicated_spec(b1d),
            _replicated_spec(w3d), _replicated_spec(s3d), _replicated_spec(b3d),
            _replicated_spec(w1n), _replicated_spec(s1n), _replicated_spec(b1n),
            _replicated_spec(w3n), _replicated_spec(s3n), _replicated_spec(b3n),
        ],
        out_specs=pl.BlockSpec((1, ho, wo, c_tot), lambda i: (i, 0, 0, 0)),
        scratch_shapes=[
            pltpu.VMEM((ho + 2, wo + 2, cd), jnp.float32),
            pltpu.VMEM((ho + 2, wo + 2, cn), jnp.float32),
        ],
        compiler_params=pltpu.CompilerParams(
            dimension_semantics=("parallel",),
            vmem_limit_bytes=32 * 1024 * 1024),
    )(x0s, x1, w1d, s1d, b1d, w3d, s3d, b3d, w1n, s1n, b1n, w3n, s3n, b3n)


# ----------------------------------------------------------------------------
# Synthetic parameters (deterministic), matching ConvBN.__init__ shapes
# ----------------------------------------------------------------------------
def _fold_bn(key, c):
    kg, kb, km, kv = jax.random.split(key, 4)
    gamma = jax.random.uniform(kg, (c,), jnp.float32, 0.5, 1.5)
    beta = jax.random.normal(kb, (c,), jnp.float32) * 0.1
    mean = jax.random.normal(km, (c,), jnp.float32) * 0.1
    var = jax.random.uniform(kv, (c,), jnp.float32, 0.5, 1.5)
    scale = gamma / jnp.sqrt(var + EPS)
    bias = beta - mean * scale
    return scale, bias


def make_convbn_params(key, n_in, n_out, bottleneck, bn_width):
    n_inner = n_in
    k1, k2, k3, k4 = jax.random.split(key, 4)
    params = {}
    if bottleneck:
        n_inner = min(n_inner, bn_width * n_out)
        params["w1"] = jax.random.normal(k1, (n_inner, n_in, 1, 1), jnp.float32) * 0.2
        params["scale1"], params["bias1"] = _fold_bn(k2, n_inner)
    params["w3"] = jax.random.normal(k3, (n_out, n_inner, 3, 3), jnp.float32) * 0.2
    params["scale3"], params["bias3"] = _fold_bn(k4, n_out)
    return params


# ----------------------------------------------------------------------------
# Pure-JAX reference (f32 HIGHEST precision) for correctness checking
# ----------------------------------------------------------------------------
def _ref_convbn(x_nhwc, params, stride):
    y = x_nhwc
    if "w1" in params:
        k1 = jnp.transpose(params["w1"], (2, 3, 1, 0))
        y = lax.conv_general_dilated(
            y, k1, (1, 1), "VALID",
            dimension_numbers=("NHWC", "HWIO", "NHWC"),
            precision=lax.Precision.HIGHEST)
        y = jnp.maximum(y * params["scale1"] + params["bias1"], 0.0)
    k3 = jnp.transpose(params["w3"], (2, 3, 1, 0))
    y = lax.conv_general_dilated(
        y, k3, (stride, stride), ((1, 1), (1, 1)),
        dimension_numbers=("NHWC", "HWIO", "NHWC"),
        precision=lax.Precision.HIGHEST)
    return jnp.maximum(y * params["scale3"] + params["bias3"], 0.0)


def _ref_forward_nhwc(x0, x1, params_down, params_normal):
    return jnp.concatenate(
        [x1, _ref_convbn(x0, params_down, 2), _ref_convbn(x1, params_normal, 1)],
        axis=-1)


if __name__ == "__main__":
    key = jax.random.PRNGKey(0)
    kx0, kx1, kd, kn = jax.random.split(key, 4)

    # Module config (bottleneck=True as typical in MSDNet).
    nIn1, nIn2, nOut = 4, 8, 8
    bottleneck, bnWidth1, bnWidth2 = True, 2, 2
    B, H, W = 2, 16, 16

    # PyTorch-layout (NCHW) inputs: x[0] fine scale (downsampled), x[1] coarse.
    x0_nchw = jax.random.normal(kx0, (B, nIn1, H, W), jnp.float32)
    x1_nchw = jax.random.normal(kx1, (B, nIn2, H // 2, W // 2), jnp.float32)

    params_down = make_convbn_params(kd, nIn1, nOut // 2, bottleneck, bnWidth1)
    params_normal = make_convbn_params(kn, nIn2, nOut // 2, bottleneck, bnWidth2)

    # NCHW -> NHWC once at the model boundary; kernels are NHWC end-to-end.
    x0 = jnp.transpose(x0_nchw, (0, 2, 3, 1))
    x1 = jnp.transpose(x1_nchw, (0, 2, 3, 1))

    fwd = jax.jit(conv_down_normal_forward_nhwc)
    out_nhwc = jax.block_until_ready(fwd(x0, x1, params_down, params_normal))
    out_nchw = jnp.transpose(out_nhwc, (0, 3, 1, 2))

    assert out_nchw.shape == (B, nIn2 + nOut, H // 2, W // 2), out_nchw.shape
    assert out_nchw.dtype == jnp.float32

    # Correctness vs. pure-JAX f32 reference (kernel uses bf16 MXU operands).
    ref_nhwc = _ref_forward_nhwc(x0, x1, params_down, params_normal)
    np.testing.assert_allclose(np.asarray(out_nhwc), np.asarray(ref_nhwc),
                               rtol=5e-2, atol=5e-2)

    print("KERNEL_OK")
</pallas_src>

<mosaic_0001>
module attributes {stable_mosaic.version = 11 : i64} {
  func.func @_fused_kernel(%arg0: i32, %arg1: memref<1x8x8x16xf32, #tpu.memory_space<vmem>>, %arg2: memref<1x8x8x8xf32, #tpu.memory_space<vmem>>, %arg3: memref<16x16xbf16, #tpu.memory_space<vmem>>, %arg4: memref<1x16xf32, #tpu.memory_space<vmem>>, %arg5: memref<1x16xf32, #tpu.memory_space<vmem>>, %arg6: memref<4x16x4xbf16, #tpu.memory_space<vmem>>, %arg7: memref<1x4xf32, #tpu.memory_space<vmem>>, %arg8: memref<1x4xf32, #tpu.memory_space<vmem>>, %arg9: memref<8x8xbf16, #tpu.memory_space<vmem>>, %arg10: memref<1x8xf32, #tpu.memory_space<vmem>>, %arg11: memref<1x8xf32, #tpu.memory_space<vmem>>, %arg12: memref<9x8x4xbf16, #tpu.memory_space<vmem>>, %arg13: memref<1x4xf32, #tpu.memory_space<vmem>>, %arg14: memref<1x4xf32, #tpu.memory_space<vmem>>, %arg15: memref<1x8x8x16xf32, #tpu.memory_space<vmem>>, %arg16: memref<10x10x16xf32, #tpu.memory_space<vmem>>, %arg17: memref<10x10x8xf32, #tpu.memory_space<vmem>>) attributes {dimension_semantics = [#tpu.dimension_semantics<parallel>], iteration_bounds = array<i64: 2>, scalar_prefetch = 0 : i64, scratch_operands = 2 : i64, tpu.core_type = #tpu.core_type<tc>, window_params = [{transform_indices = @transform_0, window_bounds = array<i64: 1, 8, 8, 16>}, {transform_indices = @transform_1, window_bounds = array<i64: 1, 8, 8, 8>}, {pipeline_mode = #tpu.pipeline_mode<synchronous>, transform_indices = @transform_2, window_bounds = array<i64: 16, 16>}, {pipeline_mode = #tpu.pipeline_mode<synchronous>, transform_indices = @transform_3, window_bounds = array<i64: 1, 16>}, {pipeline_mode = #tpu.pipeline_mode<synchronous>, transform_indices = @transform_4, window_bounds = array<i64: 1, 16>}, {pipeline_mode = #tpu.pipeline_mode<synchronous>, transform_indices = @transform_5, window_bounds = array<i64: 4, 16, 4>}, {pipeline_mode = #tpu.pipeline_mode<synchronous>, transform_indices = @transform_6, window_bounds = array<i64: 1, 4>}, {pipeline_mode = #tpu.pipeline_mode<synchronous>, transform_indices = @transform_7, window_bounds = array<i64: 1, 4>}, {pipeline_mode = #tpu.pipeline_mode<synchronous>, transform_indices = @transform_8, window_bounds = array<i64: 8, 8>}, {pipeline_mode = #tpu.pipeline_mode<synchronous>, transform_indices = @transform_9, window_bounds = array<i64: 1, 8>}, {pipeline_mode = #tpu.pipeline_mode<synchronous>, transform_indices = @transform_10, window_bounds = array<i64: 1, 8>}, {pipeline_mode = #tpu.pipeline_mode<synchronous>, transform_indices = @transform_11, window_bounds = array<i64: 9, 8, 4>}, {pipeline_mode = #tpu.pipeline_mode<synchronous>, transform_indices = @transform_12, window_bounds = array<i64: 1, 4>}, {pipeline_mode = #tpu.pipeline_mode<synchronous>, transform_indices = @transform_13, window_bounds = array<i64: 1, 4>}, {transform_indices = @transform_14, window_bounds = array<i64: 1, 8, 8, 16>}]} {
    %c0 = arith.constant 0 : index
    %c0_0 = arith.constant 0 : index
    %c0_1 = arith.constant 0 : index
    %c0_2 = arith.constant 0 : index
    %0 = vector.load %arg1[%c0, %c0_0, %c0_1, %c0_2] : memref<1x8x8x16xf32, #tpu.memory_space<vmem>>, vector<1x8x8x16xf32>
    %1 = vector.shape_cast %0 : vector<1x8x8x16xf32> to vector<64x16xf32>
    %2 = arith.truncf %1 : vector<64x16xf32> to vector<64x16xbf16>
    %c0_3 = arith.constant 0 : index
    %c0_4 = arith.constant 0 : index
    %3 = vector.load %arg3[%c0_3, %c0_4] : memref<16x16xbf16, #tpu.memory_space<vmem>>, vector<16x16xbf16>
    %cst = arith.constant dense<0.000000e+00> : vector<64x16xf32>
    %4 = tpu.matmul %2, %3, %cst {dimension_numbers = #tpu.dot_dimension_numbers<[1], [0], [0], [1], [0, 0, 1, 1], [], []>} : vector<64x16xbf16>, vector<16x16xbf16>, vector<64x16xf32> -> vector<64x16xf32>
    %c0_5 = arith.constant 0 : index
    %c0_6 = arith.constant 0 : index
    %5 = vector.load %arg4[%c0_5, %c0_6] : memref<1x16xf32, #tpu.memory_space<vmem>>, vector<1x16xf32>
    %6 = vector.broadcast %5 : vector<1x16xf32> to vector<64x16xf32>
    %7 = arith.mulf %4, %6 : vector<64x16xf32>
    %c0_7 = arith.constant 0 : index
    %c0_8 = arith.constant 0 : index
    %8 = vector.load %arg5[%c0_7, %c0_8] : memref<1x16xf32, #tpu.memory_space<vmem>>, vector<1x16xf32>
    %9 = vector.broadcast %8 : vector<1x16xf32> to vector<64x16xf32>
    %10 = arith.addf %7, %9 : vector<64x16xf32>
    %cst_9 = arith.constant 0.000000e+00 : f32
    %11 = vector.broadcast %cst_9 : f32 to vector<64x16xf32>
    %12 = arith.maximumf %10, %11 : vector<64x16xf32>
    %cst_10 = arith.constant 0.000000e+00 : f32
    %13 = vector.broadcast %cst_10 : f32 to vector<10x10x16xf32>
    %c0_11 = arith.constant 0 : index
    %c0_12 = arith.constant 0 : index
    %c0_13 = arith.constant 0 : index
    %14 = vector.load %arg16[%c0_11, %c0_12, %c0_13] : memref<10x10x16xf32, #tpu.memory_space<vmem>>, vector<10x10x16xf32>
    tpu.vector_store %arg16[%c0_11, %c0_12, %c0_13], %13 {strides = array<i32>} : memref<10x10x16xf32, #tpu.memory_space<vmem>>, vector<10x10x16xf32>,
    %15 = vector.shape_cast %12 : vector<64x16xf32> to vector<8x8x16xf32>
    %c1 = arith.constant 1 : index
    %c1_14 = arith.constant 1 : index
    %c0_15 = arith.constant 0 : index
    %16 = vector.load %arg16[%c1, %c1_14, %c0_15] : memref<10x10x16xf32, #tpu.memory_space<vmem>>, vector<8x8x16xf32>
    tpu.vector_store %arg16[%c1, %c1_14, %c0_15], %15 {strides = array<i32>} : memref<10x10x16xf32, #tpu.memory_space<vmem>>, vector<8x8x16xf32>,
    %cst_16 = arith.constant 0.000000e+00 : f32
    %17 = vector.broadcast %cst_16 : f32 to vector<64x4xf32>
    %c1_17 = arith.constant 1 : index
    %c1_18 = arith.constant 1 : index
    %c0_19 = arith.constant 0 : index
    %18 = vector.load %arg16[%c1_17, %c1_18, %c0_19] : memref<10x10x16xf32, #tpu.memory_space<vmem>>, vector<8x8x16xf32>
    %19 = vector.shape_cast %18 : vector<8x8x16xf32> to vector<64x16xf32>
    %20 = arith.truncf %19 : vector<64x16xf32> to vector<64x16xbf16>
    %c0_20 = arith.constant 0 : index
    %c0_21 = arith.constant 0 : index
    %c0_22 = arith.constant 0 : index
    %21 = vector.load %arg6[%c0_20, %c0_21, %c0_22] : memref<4x16x4xbf16, #tpu.memory_space<vmem>>, vector<1x16x4xbf16>
    %22 = vector.shape_cast %21 : vector<1x16x4xbf16> to vector<16x4xbf16>
    %cst_23 = arith.constant dense<0.000000e+00> : vector<64x4xf32>
    %23 = tpu.matmul %20, %22, %cst_23 {dimension_numbers = #tpu.dot_dimension_numbers<[1], [0], [0], [1], [0, 0, 1, 1], [], []>} : vector<64x16xbf16>, vector<16x4xbf16>, vector<64x4xf32> -> vector<64x4xf32>
    %24 = arith.addf %17, %23 : vector<64x4xf32>
    %c1_24 = arith.constant 1 : index
    %c0_25 = arith.constant 0 : index
    %c0_26 = arith.constant 0 : index
    %25 = vector.load %arg16[%c1_24, %c0_25, %c0_26] : memref<10x10x16xf32, #tpu.memory_space<vmem>>, vector<8x8x16xf32>
    %26 = vector.shape_cast %25 : vector<8x8x16xf32> to vector<64x16xf32>
    %27 = arith.truncf %26 : vector<64x16xf32> to vector<64x16xbf16>
    %c1_27 = arith.constant 1 : index
    %c0_28 = arith.constant 0 : index
    %c0_29 = arith.constant 0 : index
    %28 = vector.load %arg6[%c1_27, %c0_28, %c0_29] : memref<4x16x4xbf16, #tpu.memory_space<vmem>>, vector<1x16x4xbf16>
    %29 = vector.shape_cast %28 : vector<1x16x4xbf16> to vector<16x4xbf16>
    %cst_30 = arith.constant dense<0.000000e+00> : vector<64x4xf32>
    %30 = tpu.matmul %27, %29, %cst_30 {dimension_numbers = #tpu.dot_dimension_numbers<[1], [0], [0], [1], [0, 0, 1, 1], [], []>} : vector<64x16xbf16>, vector<16x4xbf16>, vector<64x4xf32> -> vector<64x4xf32>
    %31 = arith.addf %24, %30 : vector<64x4xf32>
    %c0_31 = arith.constant 0 : index
    %c1_32 = arith.constant 1 : index
    %c0_33 = arith.constant 0 : index
    %32 = vector.load %arg16[%c0_31, %c1_32, %c0_33] : memref<10x10x16xf32, #tpu.memory_space<vmem>>, vector<8x8x16xf32>
    %33 = vector.shape_cast %32 : vector<8x8x16xf32> to vector<64x16xf32>
    %34 = arith.truncf %33 : vector<64x16xf32> to vector<64x16xbf16>
    %c2 = arith.constant 2 : index
    %c0_34 = arith.constant 0 : index
    %c0_35 = arith.constant 0 : index
    %35 = vector.load %arg6[%c2, %c0_34, %c0_35] : memref<4x16x4xbf16, #tpu.memory_space<vmem>>, vector<1x16x4xbf16>
    %36 = vector.shape_cast %35 : vector<1x16x4xbf16> to vector<16x4xbf16>
    %cst_36 = arith.constant dense<0.000000e+00> : vector<64x4xf32>
    %37 = tpu.matmul %34, %36, %cst_36 {dimension_numbers = #tpu.dot_dimension_numbers<[1], [0], [0], [1], [0, 0, 1, 1], [], []>} : vector<64x16xbf16>, vector<16x4xbf16>, vector<64x4xf32> -> vector<64x4xf32>
    %38 = arith.addf %31, %37 : vector<64x4xf32>
    %c0_37 = arith.constant 0 : index
    %c0_38 = arith.constant 0 : index
    %c0_39 = arith.constant 0 : index
    %39 = vector.load %arg16[%c0_37, %c0_38, %c0_39] : memref<10x10x16xf32, #tpu.memory_space<vmem>>, vector<8x8x16xf32>
    %40 = vector.shape_cast %39 : vector<8x8x16xf32> to vector<64x16xf32>
    %41 = arith.truncf %40 : vector<64x16xf32> to vector<64x16xbf16>
    %c3 = arith.constant 3 : index
    %c0_40 = arith.constant 0 : index
    %c0_41 = arith.constant 0 : index
    %42 = vector.load %arg6[%c3, %c0_40, %c0_41] : memref<4x16x4xbf16, #tpu.memory_space<vmem>>, vector<1x16x4xbf16>
    %43 = vector.shape_cast %42 : vector<1x16x4xbf16> to vector<16x4xbf16>
    %cst_42 = arith.constant dense<0.000000e+00> : vector<64x4xf32>
    %44 = tpu.matmul %41, %43, %cst_42 {dimension_numbers = #tpu.dot_dimension_numbers<[1], [0], [0], [1], [0, 0, 1, 1], [], []>} : vector<64x16xbf16>, vector<16x4xbf16>, vector<64x4xf32> -> vector<64x4xf32>
    %45 = arith.addf %38, %44 : vector<64x4xf32>
    %c0_43 = arith.constant 0 : index
    %c0_44 = arith.constant 0 : index
    %46 = vector.load %arg7[%c0_43, %c0_44] : memref<1x4xf32, #tpu.memory_space<vmem>>, vector<1x4xf32>
    %47 = vector.broadcast %46 : vector<1x4xf32> to vector<64x4xf32>
    %48 = arith.mulf %45, %47 : vector<64x4xf32>
    %c0_45 = arith.constant 0 : index
    %c0_46 = arith.constant 0 : index
    %49 = vector.load %arg8[%c0_45, %c0_46] : memref<1x4xf32, #tpu.memory_space<vmem>>, vector<1x4xf32>
    %50 = vector.broadcast %49 : vector<1x4xf32> to vector<64x4xf32>
    %51 = arith.addf %48, %50 : vector<64x4xf32>
    %cst_47 = arith.constant 0.000000e+00 : f32
    %52 = vector.broadcast %cst_47 : f32 to vector<64x4xf32>
    %53 = arith.maximumf %51, %52 : vector<64x4xf32>
    %c0_48 = arith.constant 0 : index
    %c0_49 = arith.constant 0 : index
    %c0_50 = arith.constant 0 : index
    %c0_51 = arith.constant 0 : index
    %54 = vector.load %arg2[%c0_48, %c0_49, %c0_50, %c0_51] : memref<1x8x8x8xf32, #tpu.memory_space<vmem>>, vector<1x8x8x8xf32>
    %55 = vector.shape_cast %54 : vector<1x8x8x8xf32> to vector<64x8xf32>
    %56 = arith.truncf %55 : vector<64x8xf32> to vector<64x8xbf16>
    %c0_52 = arith.constant 0 : index
    %c0_53 = arith.constant 0 : index
    %57 = vector.load %arg9[%c0_52, %c0_53] : memref<8x8xbf16, #tpu.memory_space<vmem>>, vector<8x8xbf16>
    %cst_54 = arith.constant dense<0.000000e+00> : vector<64x8xf32>
    %58 = tpu.matmul %56, %57, %cst_54 {dimension_numbers = #tpu.dot_dimension_numbers<[1], [0], [0], [1], [0, 0, 1, 1], [], []>} : vector<64x8xbf16>, vector<8x8xbf16>, vector<64x8xf32> -> vector<64x8xf32>
    %c0_55 = arith.constant 0 : index
    %c0_56 = arith.constant 0 : index
    %59 = vector.load %arg10[%c0_55, %c0_56] : memref<1x8xf32, #tpu.memory_space<vmem>>, vector<1x8xf32>
    %60 = vector.broadcast %59 : vector<1x8xf32> to vector<64x8xf32>
    %61 = arith.mulf %58, %60 : vector<64x8xf32>
    %c0_57 = arith.constant 0 : index
    %c0_58 = arith.constant 0 : index
    %62 = vector.load %arg11[%c0_57, %c0_58] : memref<1x8xf32, #tpu.memory_space<vmem>>, vector<1x8xf32>
    %63 = vector.broadcast %62 : vector<1x8xf32> to vector<64x8xf32>
    %64 = arith.addf %61, %63 : vector<64x8xf32>
    %cst_59 = arith.constant 0.000000e+00 : f32
    %65 = vector.broadcast %cst_59 : f32 to vector<64x8xf32>
    %66 = arith.maximumf %64, %65 : vector<64x8xf32>
    %cst_60 = arith.constant 0.000000e+00 : f32
    %67 = vector.broadcast %cst_60 : f32 to vector<10x10x8xf32>
    %c0_61 = arith.constant 0 : index
    %c0_62 = arith.constant 0 : index
    %c0_63 = arith.constant 0 : index
    %68 = vector.load %arg17[%c0_61, %c0_62, %c0_63] : memref<10x10x8xf32, #tpu.memory_space<vmem>>, vector<10x10x8xf32>
    tpu.vector_store %arg17[%c0_61, %c0_62, %c0_63], %67 {strides = array<i32>} : memref<10x10x8xf32, #tpu.memory_space<vmem>>, vector<10x10x8xf32>,
    %69 = vector.shape_cast %66 : vector<64x8xf32> to vector<8x8x8xf32>
    %c1_64 = arith.constant 1 : index
    %c1_65 = arith.constant 1 : index
    %c0_66 = arith.constant 0 : index
    %70 = vector.load %arg17[%c1_64, %c1_65, %c0_66] : memref<10x10x8xf32, #tpu.memory_space<vmem>>, vector<8x8x8xf32>
    tpu.vector_store %arg17[%c1_64, %c1_65, %c0_66], %69 {strides = array<i32>} : memref<10x10x8xf32, #tpu.memory_space<vmem>>, vector<8x8x8xf32>,
    %cst_67 = arith.constant 0.000000e+00 : f32
    %71 = vector.broadcast %cst_67 : f32 to vector<64x4xf32>
    %c0_68 = arith.constant 0 : index
    %c0_69 = arith.constant 0 : index
    %c0_70 = arith.constant 0 : index
    %72 = vector.load %arg17[%c0_68, %c0_69, %c0_70] : memref<10x10x8xf32, #tpu.memory_space<vmem>>, vector<8x8x8xf32>
    %73 = vector.shape_cast %72 : vector<8x8x8xf32> to vector<64x8xf32>
    %74 = arith.truncf %73 : vector<64x8xf32> to vector<64x8xbf16>
    %c0_71 = arith.constant 0 : index
    %c0_72 = arith.constant 0 : index
    %c0_73 = arith.constant 0 : index
    %75 = vector.load %arg12[%c0_71, %c0_72, %c0_73] : memref<9x8x4xbf16, #tpu.memory_space<vmem>>, vector<1x8x4xbf16>
    %76 = vector.shape_cast %75 : vector<1x8x4xbf16> to vector<8x4xbf16>
    %cst_74 = arith.constant dense<0.000000e+00> : vector<64x4xf32>
    %77 = tpu.matmul %74, %76, %cst_74 {dimension_numbers = #tpu.dot_dimension_numbers<[1], [0], [0], [1], [0, 0, 1, 1], [], []>} : vector<64x8xbf16>, vector<8x4xbf16>, vector<64x4xf32> -> vector<64x4xf32>
    %78 = arith.addf %71, %77 : vector<64x4xf32>
    %c0_75 = arith.constant 0 : index
    %c1_76 = arith.constant 1 : index
    %c0_77 = arith.constant 0 : index
    %79 = vector.load %arg17[%c0_75, %c1_76, %c0_77] : memref<10x10x8xf32, #tpu.memory_space<vmem>>, vector<8x8x8xf32>
    %80 = vector.shape_cast %79 : vector<8x8x8xf32> to vector<64x8xf32>
    %81 = arith.truncf %80 : vector<64x8xf32> to vector<64x8xbf16>
    %c1_78 = arith.constant 1 : index
    %c0_79 = arith.constant 0 : index
    %c0_80 = arith.constant 0 : index
    %82 = vector.load %arg12[%c1_78, %c0_79, %c0_80] : memref<9x8x4xbf16, #tpu.memory_space<vmem>>, vector<1x8x4xbf16>
    %83 = vector.shape_cast %82 : vector<1x8x4xbf16> to vector<8x4xbf16>
    %cst_81 = arith.constant dense<0.000000e+00> : vector<64x4xf32>
    %84 = tpu.matmul %81, %83, %cst_81 {dimension_numbers = #tpu.dot_dimension_numbers<[1], [0], [0], [1], [0, 0, 1, 1], [], []>} : vector<64x8xbf16>, vector<8x4xbf16>, vector<64x4xf32> -> vector<64x4xf32>
    %85 = arith.addf %78, %84 : vector<64x4xf32>
    %c0_82 = arith.constant 0 : index
    %c2_83 = arith.constant 2 : index
    %c0_84 = arith.constant 0 : index
    %86 = vector.load %arg17[%c0_82, %c2_83, %c0_84] : memref<10x10x8xf32, #tpu.memory_space<vmem>>, vector<8x8x8xf32>
    %87 = vector.shape_cast %86 : vector<8x8x8xf32> to vector<64x8xf32>
    %88 = arith.truncf %87 : vector<64x8xf32> to vector<64x8xbf16>
    %c2_85 = arith.constant 2 : index
    %c0_86 = arith.constant 0 : index
    %c0_87 = arith.constant 0 : index
    %89 = vector.load %arg12[%c2_85, %c0_86, %c0_87] : memref<9x8x4xbf16, #tpu.memory_space<vmem>>, vector<1x8x4xbf16>
    %90 = vector.shape_cast %89 : vector<1x8x4xbf16> to vector<8x4xbf16>
    %cst_88 = arith.constant dense<0.000000e+00> : vector<64x4xf32>
    %91 = tpu.matmul %88, %90, %cst_88 {dimension_numbers = #tpu.dot_dimension_numbers<[1], [0], [0], [1], [0, 0, 1, 1], [], []>} : vector<64x8xbf16>, vector<8x4xbf16>, vector<64x4xf32> -> vector<64x4xf32>
    %92 = arith.addf %85, %91 : vector<64x4xf32>
    %c1_89 = arith.constant 1 : index
    %c0_90 = arith.constant 0 : index
    %c0_91 = arith.constant 0 : index
    %93 = vector.load %arg17[%c1_89, %c0_90, %c0_91] : memref<10x10x8xf32, #tpu.memory_space<vmem>>, vector<8x8x8xf32>
    %94 = vector.shape_cast %93 : vector<8x8x8xf32> to vector<64x8xf32>
    %95 = arith.truncf %94 : vector<64x8xf32> to vector<64x8xbf16>
    %c3_92 = arith.constant 3 : index
    %c0_93 = arith.constant 0 : index
    %c0_94 = arith.constant 0 : index
    %96 = vector.load %arg12[%c3_92, %c0_93, %c0_94] : memref<9x8x4xbf16, #tpu.memory_space<vmem>>, vector<1x8x4xbf16>
    %97 = vector.shape_cast %96 : vector<1x8x4xbf16> to vector<8x4xbf16>
    %cst_95 = arith.constant dense<0.000000e+00> : vector<64x4xf32>
    %98 = tpu.matmul %95, %97, %cst_95 {dimension_numbers = #tpu.dot_dimension_numbers<[1], [0], [0], [1], [0, 0, 1, 1], [], []>} : vector<64x8xbf16>, vector<8x4xbf16>, vector<64x4xf32> -> vector<64x4xf32>
    %99 = arith.addf %92, %98 : vector<64x4xf32>
    %c1_96 = arith.constant 1 : index
    %c1_97 = arith.constant 1 : index
    %c0_98 = arith.constant 0 : index
    %100 = vector.load %arg17[%c1_96, %c1_97, %c0_98] : memref<10x10x8xf32, #tpu.memory_space<vmem>>, vector<8x8x8xf32>
    %101 = vector.shape_cast %100 : vector<8x8x8xf32> to vector<64x8xf32>
    %102 = arith.truncf %101 : vector<64x8xf32> to vector<64x8xbf16>
    %c4 = arith.constant 4 : index
    %c0_99 = arith.constant 0 : index
    %c0_100 = arith.constant 0 : index
    %103 = vector.load %arg12[%c4, %c0_99, %c0_100] : memref<9x8x4xbf16, #tpu.memory_space<vmem>>, vector<1x8x4xbf16>
    %104 = vector.shape_cast %103 : vector<1x8x4xbf16> to vector<8x4xbf16>
    %cst_101 = arith.constant dense<0.000000e+00> : vector<64x4xf32>
    %105 = tpu.matmul %102, %104, %cst_101 {dimension_numbers = #tpu.dot_dimension_numbers<[1], [0], [0], [1], [0, 0, 1, 1], [], []>} : vector<64x8xbf16>, vector<8x4xbf16>, vector<64x4xf32> -> vector<64x4xf32>
    %106 = arith.addf %99, %105 : vector<64x4xf32>
    %c1_102 = arith.constant 1 : index
    %c2_103 = arith.constant 2 : index
    %c0_104 = arith.constant 0 : index
    %107 = vector.load %arg17[%c1_102, %c2_103, %c0_104] : memref<10x10x8xf32, #tpu.memory_space<vmem>>, vector<8x8x8xf32>
    %108 = vector.shape_cast %107 : vector<8x8x8xf32> to vector<64x8xf32>
    %109 = arith.truncf %108 : vector<64x8xf32> to vector<64x8xbf16>
    %c5 = arith.constant 5 : index
    %c0_105 = arith.constant 0 : index
    %c0_106 = arith.constant 0 : index
    %110 = vector.load %arg12[%c5, %c0_105, %c0_106] : memref<9x8x4xbf16, #tpu.memory_space<vmem>>, vector<1x8x4xbf16>
    %111 = vector.shape_cast %110 : vector<1x8x4xbf16> to vector<8x4xbf16>
    %cst_107 = arith.constant dense<0.000000e+00> : vector<64x4xf32>
    %112 = tpu.matmul %109, %111, %cst_107 {dimension_numbers = #tpu.dot_dimension_numbers<[1], [0], [0], [1], [0, 0, 1, 1], [], []>} : vector<64x8xbf16>, vector<8x4xbf16>, vector<64x4xf32> -> vector<64x4xf32>
    %113 = arith.addf %106, %112 : vector<64x4xf32>
    %c2_108 = arith.constant 2 : index
    %c0_109 = arith.constant 0 : index
    %c0_110 = arith.constant 0 : index
    %114 = vector.load %arg17[%c2_108, %c0_109, %c0_110] : memref<10x10x8xf32, #tpu.memory_space<vmem>>, vector<8x8x8xf32>
    %115 = vector.shape_cast %114 : vector<8x8x8xf32> to vector<64x8xf32>
    %116 = arith.truncf %115 : vector<64x8xf32> to vector<64x8xbf16>
    %c6 = arith.constant 6 : index
    %c0_111 = arith.constant 0 : index
    %c0_112 = arith.constant 0 : index
    %117 = vector.load %arg12[%c6, %c0_111, %c0_112] : memref<9x8x4xbf16, #tpu.memory_space<vmem>>, vector<1x8x4xbf16>
    %118 = vector.shape_cast %117 : vector<1x8x4xbf16> to vector<8x4xbf16>
    %cst_113 = arith.constant dense<0.000000e+00> : vector<64x4xf32>
    %119 = tpu.matmul %116, %118, %cst_113 {dimension_numbers = #tpu.dot_dimension_numbers<[1], [0], [0], [1], [0, 0, 1, 1], [], []>} : vector<64x8xbf16>, vector<8x4xbf16>, vector<64x4xf32> -> vector<64x4xf32>
    %120 = arith.addf %113, %119 : vector<64x4xf32>
    %c2_114 = arith.constant 2 : index
    %c1_115 = arith.constant 1 : index
    %c0_116 = arith.constant 0 : index
    %121 = vector.load %arg17[%c2_114, %c1_115, %c0_116] : memref<10x10x8xf32, #tpu.memory_space<vmem>>, vector<8x8x8xf32>
    %122 = vector.shape_cast %121 : vector<8x8x8xf32> to vector<64x8xf32>
    %123 = arith.truncf %122 : vector<64x8xf32> to vector<64x8xbf16>
    %c7 = arith.constant 7 : index
    %c0_117 = arith.constant 0 : index
    %c0_118 = arith.constant 0 : index
    %124 = vector.load %arg12[%c7, %c0_117, %c0_118] : memref<9x8x4xbf16, #tpu.memory_space<vmem>>, vector<1x8x4xbf16>
    %125 = vector.shape_cast %124 : vector<1x8x4xbf16> to vector<8x4xbf16>
    %cst_119 = arith.constant dense<0.000000e+00> : vector<64x4xf32>
    %126 = tpu.matmul %123, %125, %cst_119 {dimension_numbers = #tpu.dot_dimension_numbers<[1], [0], [0], [1], [0, 0, 1, 1], [], []>} : vector<64x8xbf16>, vector<8x4xbf16>, vector<64x4xf32> -> vector<64x4xf32>
    %127 = arith.addf %120, %126 : vector<64x4xf32>
    %c2_120 = arith.constant 2 : index
    %c2_121 = arith.constant 2 : index
    %c0_122 = arith.constant 0 : index
    %128 = vector.load %arg17[%c2_120, %c2_121, %c0_122] : memref<10x10x8xf32, #tpu.memory_space<vmem>>, vector<8x8x8xf32>
    %129 = vector.shape_cast %128 : vector<8x8x8xf32> to vector<64x8xf32>
    %130 = arith.truncf %129 : vector<64x8xf32> to vector<64x8xbf16>
    %c8 = arith.constant 8 : index
    %c0_123 = arith.constant 0 : index
    %c0_124 = arith.constant 0 : index
    %131 = vector.load %arg12[%c8, %c0_123, %c0_124] : memref<9x8x4xbf16, #tpu.memory_space<vmem>>, vector<1x8x4xbf16>
    %132 = vector.shape_cast %131 : vector<1x8x4xbf16> to vector<8x4xbf16>
    %cst_125 = arith.constant dense<0.000000e+00> : vector<64x4xf32>
    %133 = tpu.matmul %130, %132, %cst_125 {dimension_numbers = #tpu.dot_dimension_numbers<[1], [0], [0], [1], [0, 0, 1, 1], [], []>} : vector<64x8xbf16>, vector<8x4xbf16>, vector<64x4xf32> -> vector<64x4xf32>
    %134 = arith.addf %127, %133 : vector<64x4xf32>
    %c0_126 = arith.constant 0 : index
    %c0_127 = arith.constant 0 : index
    %135 = vector.load %arg13[%c0_126, %c0_127] : memref<1x4xf32, #tpu.memory_space<vmem>>, vector<1x4xf32>
    %136 = vector.broadcast %135 : vector<1x4xf32> to vector<64x4xf32>
    %137 = arith.mulf %134, %136 : vector<64x4xf32>
    %c0_128 = arith.constant 0 : index
    %c0_129 = arith.constant 0 : index
    %138 = vector.load %arg14[%c0_128, %c0_129] : memref<1x4xf32, #tpu.memory_space<vmem>>, vector<1x4xf32>
    %139 = vector.broadcast %138 : vector<1x4xf32> to vector<64x4xf32>
    %140 = arith.addf %137, %139 : vector<64x4xf32>
    %cst_130 = arith.constant 0.000000e+00 : f32
    %141 = vector.broadcast %cst_130 : f32 to vector<64x4xf32>
    %142 = arith.maximumf %140, %141 : vector<64x4xf32>
    %c0_131 = arith.constant 0 : index
    %c0_132 = arith.constant 0 : index
    %c0_133 = arith.constant 0 : index
    %c0_134 = arith.constant 0 : index
    %143 = vector.load %arg2[%c0_131, %c0_132, %c0_133, %c0_134] : memref<1x8x8x8xf32, #tpu.memory_space<vmem>>, vector<1x8x8x8xf32>
    %144 = vector.shape_cast %143 : vector<1x8x8x8xf32> to vector<64x8xf32>
    %145 = tpu.concatenate %144, %53, %142 in 1 : vector<64x8xf32>, vector<64x4xf32>, vector<64x4xf32> -> vector<64x16xf32>
    %146 = vector.shape_cast %145 : vector<64x16xf32> to vector<1x8x8x16xf32>
    %c0_135 = arith.constant 0 : index
    %c0_136 = arith.constant 0 : index
    %c0_137 = arith.constant 0 : index
    %c0_138 = arith.constant 0 : index
    %147 = vector.load %arg15[%c0_135, %c0_136, %c0_137, %c0_138] : memref<1x8x8x16xf32, #tpu.memory_space<vmem>>, vector<1x8x8x16xf32>
    tpu.vector_store %arg15[%c0_135, %c0_136, %c0_137, %c0_138], %146 {strides = array<i32>} : memref<1x8x8x16xf32, #tpu.memory_space<vmem>>, vector<1x8x8x16xf32>,
    return
  }
  func.func @transform_0(%arg0: i32) -> (i32, i32, i32, i32) {
    %c0_i32 = arith.constant 0 : i32
    %c0_i32_0 = arith.constant 0 : i32
    %c0_i32_1 = arith.constant 0 : i32
    %c0_i32_2 = arith.constant 0 : i32
    return %arg0, %c0_i32, %c0_i32_0, %c0_i32_1 : i32, i32, i32, i32
  }
  func.func @transform_1(%arg0: i32) -> (i32, i32, i32, i32) {
    %c0_i32 = arith.constant 0 : i32
    %c0_i32_0 = arith.constant 0 : i32
    %c0_i32_1 = arith.constant 0 : i32
    %c0_i32_2 = arith.constant 0 : i32
    return %arg0, %c0_i32, %c0_i32_0, %c0_i32_1 : i32, i32, i32, i32
  }
  func.func @transform_2(%arg0: i32) -> (i32, i32) {
    %c0_i32 = arith.constant 0 : i32
    %c0_i32_0 = arith.constant 0 : i32
    %c0_i32_1 = arith.constant 0 : i32
    return %c0_i32, %c0_i32_0 : i32, i32
  }
  func.func @transform_3(%arg0: i32) -> (i32, i32) {
    %c0_i32 = arith.constant 0 : i32
    %c0_i32_0 = arith.constant 0 : i32
    %c0_i32_1 = arith.constant 0 : i32
    return %c0_i32, %c0_i32_0 : i32, i32
  }
  func.func @transform_4(%arg0: i32) -> (i32, i32) {
    %c0_i32 = arith.constant 0 : i32
    %c0_i32_0 = arith.constant 0 : i32
    %c0_i32_1 = arith.constant 0 : i32
    return %c0_i32, %c0_i32_0 : i32, i32
  }
  func.func @transform_5(%arg0: i32) -> (i32, i32, i32) {
    %c0_i32 = arith.constant 0 : i32
    %c0_i32_0 = arith.constant 0 : i32
    %c0_i32_1 = arith.constant 0 : i32
    %c0_i32_2 = arith.constant 0 : i32
    return %c0_i32, %c0_i32_0, %c0_i32_1 : i32, i32, i32
  }
  func.func @transform_6(%arg0: i32) -> (i32, i32) {
    %c0_i32 = arith.constant 0 : i32
    %c0_i32_0 = arith.constant 0 : i32
    %c0_i32_1 = arith.constant 0 : i32
    return %c0_i32, %c0_i32_0 : i32, i32
  }
  func.func @transform_7(%arg0: i32) -> (i32, i32) {
    %c0_i32 = arith.constant 0 : i32
    %c0_i32_0 = arith.constant 0 : i32
    %c0_i32_1 = arith.constant 0 : i32
    return %c0_i32, %c0_i32_0 : i32, i32
  }
  func.func @transform_8(%arg0: i32) -> (i32, i32) {
    %c0_i32 = arith.constant 0 : i32
    %c0_i32_0 = arith.constant 0 : i32
    %c0_i32_1 = arith.constant 0 : i32
    return %c0_i32, %c0_i32_0 : i32, i32
  }
  func.func @transform_9(%arg0: i32) -> (i32, i32) {
    %c0_i32 = arith.constant 0 : i32
    %c0_i32_0 = arith.constant 0 : i32
    %c0_i32_1 = arith.constant 0 : i32
    return %c0_i32, %c0_i32_0 : i32, i32
  }
  func.func @transform_10(%arg0: i32) -> (i32, i32) {
    %c0_i32 = arith.constant 0 : i32
    %c0_i32_0 = arith.constant 0 : i32
    %c0_i32_1 = arith.constant 0 : i32
    return %c0_i32, %c0_i32_0 : i32, i32
  }
  func.func @transform_11(%arg0: i32) -> (i32, i32, i32) {
    %c0_i32 = arith.constant 0 : i32
    %c0_i32_0 = arith.constant 0 : i32
    %c0_i32_1 = arith.constant 0 : i32
    %c0_i32_2 = arith.constant 0 : i32
    return %c0_i32, %c0_i32_0, %c0_i32_1 : i32, i32, i32
  }
  func.func @transform_12(%arg0: i32) -> (i32, i32) {
    %c0_i32 = arith.constant 0 : i32
    %c0_i32_0 = arith.constant 0 : i32
    %c0_i32_1 = arith.constant 0 : i32
    return %c0_i32, %c0_i32_0 : i32, i32
  }
  func.func @transform_13(%arg0: i32) -> (i32, i32) {
    %c0_i32 = arith.constant 0 : i32
    %c0_i32_0 = arith.constant 0 : i32
    %c0_i32_1 = arith.constant 0 : i32
    return %c0_i32, %c0_i32_0 : i32, i32
  }
  func.func @transform_14(%arg0: i32) -> (i32, i32, i32, i32) {
    %c0_i32 = arith.constant 0 : i32
    %c0_i32_0 = arith.constant 0 : i32
    %c0_i32_1 = arith.constant 0 : i32
    %c0_i32_2 = arith.constant 0 : i32
    return %arg0, %c0_i32, %c0_i32_0, %c0_i32_1 : i32, i32, i32, i32
  }
}

</mosaic_0001>

<llo_original>
// kernel: tile.13
$region0: #{tile.13}
  #allocation0 [shape = 's32[1]{0}', space=sflag, size = 0x4, scoped, tag = 'scoped memory for tile.13']
  %s0 = inlined_call_operand.vmem [shape: f32[4], index: 0, kind: input, shape index: {}]
  %s1 = inlined_call_operand.vmem [shape: f32[4,4], index: 1, kind: output, shape index: {}]
  // Predicated region
  $region2: #{tile.13} parent=0 // pred_check
    _
  $region3: #{tile.13} parent=0 // pred_check_branch
    %3 = sbr.rel (0) target = $region5
  $region4: #{tile.13} parent=0 // pred_region
    _
  $region5: #{tile.13} parent=0 // pred_fallthru
    _
  %v4 = vld [vmem:[%s0] ss:$0 sm:$0xff]
  %5 = vst [vmem:[%s1] sm:$0xf] %v4

// kernel: tile.18
$region0: #{tile.18}
  %s0 = inlined_call_operand.vmem [shape: f32[4,4], index: 0, kind: input, shape index: {}]
  %s1 = inlined_call_operand.vmem [shape: f32[1,16], index: 1, kind: output, shape index: {}]
  $region1: #{tile.18} parent=0
    #allocation0 [shape = 'u8[4096]{0}', space=vmem, size = 0x1000, scoped, tag = 'scoped mem for output reshape']
    #allocation1 [shape = 'u8[4096]{0}', space=vmem, size = 0x1000, scoped, tag = 'scoped mem for input reshape']
    %s3 = sshll.u32 1, 4
    %s4 = ssub.s32 %s3, 1
    %v5 = vld [vmem:[%s0] sm:%s4]
    %6 = vst [vmem:[#allocation1] sm:%s4] %v5
    %v7 = vld [vmem:[#allocation1] sm:$0x1]
    %vm8 = vcmask 31744
    %9 = vst.msk [vmem:[#allocation0] sm:$0x1] %vm8, %v7
    %s10 = scalar_lea.vmem [#allocation1], 3
    %v11 = vld [vmem:[%s10] sm:$0x1]
    %12 = vrot.lane.b32.xlu0 %v11, 12
    %v13 = vpop.permute.xlu0 %12
    %vm14 = vcmask 130144
    %15 = vst.msk [vmem:[#allocation0] sm:$0x1] %vm14, %v13
    %s16 = scalar_lea.vmem [#allocation1], 2
    %v17 = vld [vmem:[%s16] sm:$0x1]
    %18 = vrot.lane.b32.xlu0 %v17, 8
    %v19 = vpop.permute.xlu0 %18
    %vm20 = vcmask 97344
    %21 = vst.msk [vmem:[#allocation0] sm:$0x1] %vm20, %v19
    %s22 = scalar_lea.vmem [#allocation1], 1
    %v23 = vld [vmem:[%s22] sm:$0x1]
    %24 = vrot.lane.b32.xlu0 %v23, 4
    %v25 = vpop.permute.xlu0 %24
    %vm26 = vcmask 64544
    %27 = vst.msk [vmem:[#allocation0] sm:$0x1] %vm26, %v25
    %s29 = sshll.u32 1, 1
    %s30 = ssub.s32 %s29, 1
    %v32 = vld [vmem:[#allocation0] sm:%s30]
    %s33 = sshll.u32 1, 1
    %s34 = ssub.s32 %s33, 1
    %35 = vst [vmem:[%s1] sm:%s34] %v32

// kernel: conv_down_normal_forward_nhwc.1
$region0: #{conv_down_normal_forward_nhwc.1}
  #allocation0 [shape = 'u32[]', space=smem, size = 0x4, offset = 0x4, fixed_abs, tag = 'smem constant byte address 0x4 - core index']
  #allocation1 [shape = 'u32[144,128]{1,0:T(1,128)}', space=vmem, size = 0x12000, scoped, tag = 'internal scratch']
  #allocation2 [shape = 'f32[10,10,16]{2,1,0:T(8,128)}', space=vmem, size = 0x14000, scoped, tag = 'scratch operand']
  #allocation3 [shape = 'f32[10,10,8]{2,1,0:T(8,128)}', space=vmem, size = 0x14000, scoped, tag = 'scratch operand']
  %s0 = inlined_call_operand.vmem [shape: f32[2,8,8,16], index: 0, kind: input, shape index: {}]
  %s1 = inlined_call_operand.vmem [shape: f32[2,8,8,8], index: 1, kind: input, shape index: {}]
  %s2 = inlined_call_operand.vmem [shape: bf16[16,16], index: 2, kind: input, shape index: {}]
  %s3 = inlined_call_operand.vmem [shape: f32[1,16], index: 3, kind: input, shape index: {}]
  %s4 = inlined_call_operand.vmem [shape: f32[1,16], index: 4, kind: input, shape index: {}]
  %s5 = inlined_call_operand.vmem [shape: bf16[4,16,4], index: 5, kind: input, shape index: {}]
  %s6 = inlined_call_operand.vmem [shape: f32[1,4], index: 6, kind: input, shape index: {}]
  %s7 = inlined_call_operand.vmem [shape: f32[1,4], index: 7, kind: input, shape index: {}]
  %s8 = inlined_call_operand.vmem [shape: bf16[8,8], index: 8, kind: input, shape index: {}]
  %s9 = inlined_call_operand.vmem [shape: f32[1,8], index: 9, kind: input, shape index: {}]
  %s10 = inlined_call_operand.vmem [shape: f32[1,8], index: 10, kind: input, shape index: {}]
  %s11 = inlined_call_operand.vmem [shape: bf16[9,8,4], index: 11, kind: input, shape index: {}]
  %s12 = inlined_call_operand.vmem [shape: f32[1,4], index: 12, kind: input, shape index: {}]
  %s13 = inlined_call_operand.vmem [shape: f32[1,4], index: 13, kind: input, shape index: {}]
  %s14 = inlined_call_operand.hbm [shape: f32[2,8,8,16], index: 14, kind: output, shape index: {}]
  %s15 = sld [smem:[#allocation0]]
  $region89: #{conv_down_normal_forward_nhwc.1} parent=0
    _
  %s17 = ssub.s32 1, %s15
  %s18 = scalar_select 0, %s17, %s15
  $region1: #{conv_down_normal_forward_nhwc.1} parent=0
    #allocation4 [shape = 'u8[65536]{0}', space=vmem, size = 0x10000, scoped, tag = 'output window, operand 0']
    #allocation5 [shape = 's32[2]{0}', space=sflag, size = 0x8, scoped, tag = 'scoped memory for conv_down_normal_forward_nhwc.1']
    %19 = vsyncpa [#allocation5], 0
    %s20 = scalar_lea.sflag [#allocation5], 1
    %21 = vsyncpa %s20, 0
    loop: start=0, step=1, limit=4
    $region2: #{conv_down_normal_forward_nhwc.1} parent=1 // loop_pre_header
      _
    $region3: #{conv_down_normal_forward_nhwc.1} parent=1 // loop_header
      %s23 = sphi 0, %s27
      %p24 = scmp.ge.s32.totalorder %s23, 4
      %s33 = sphi 0, %s35
      %s36 = sphi 0, %s33
      %s37 = sphi 0, %s36
      %s53 = sphi 0, %s37
      %s59 = sphi 0, %s61
      %s62 = sphi 0, %s59
      %s63 = sphi 0, %s62
      %s79 = sphi 0, %s63
      %s83 = sphi 0, %s83
      %s85 = sphi 0, %s83
      %s86 = sphi 0, %s85
      %s100 = sphi 0, %s86
      %s104 = sphi 0, %s104
      %s106 = sphi 0, %s104
      %s107 = sphi 0, %s106
      %s121 = sphi 0, %s107
      %s125 = sphi 0, %s125
      %s127 = sphi 0, %s125
      %s128 = sphi 0, %s127
      %s142 = sphi 0, %s128
      %s146 = sphi 0, %s146
      %s148 = sphi 0, %s146
      %s149 = sphi 0, %s148
      %s163 = sphi 0, %s149
      %s167 = sphi 0, %s167
      %s169 = sphi 0, %s167
      %s170 = sphi 0, %s169
      %s184 = sphi 0, %s170
      %s188 = sphi 0, %s188
      %s190 = sphi 0, %s188
      %s191 = sphi 0, %s190
      %s205 = sphi 0, %s191
      %s209 = sphi 0, %s209
      %s211 = sphi 0, %s209
      %s212 = sphi 0, %s211
      %s226 = sphi 0, %s212
      %s230 = sphi 0, %s230
      %s232 = sphi 0, %s230
      %s233 = sphi 0, %s232
      %s247 = sphi 0, %s233
      %s251 = sphi 0, %s251
      %s253 = sphi 0, %s251
      %s254 = sphi 0, %s253
      %s268 = sphi 0, %s254
      %s272 = sphi 0, %s272
      %s274 = sphi 0, %s272
      %s275 = sphi 0, %s274
      %s289 = sphi 0, %s275
      %s293 = sphi 0, %s293
      %s295 = sphi 0, %s293
      %s296 = sphi 0, %s295
      %s310 = sphi 0, %s296
      %s314 = sphi 0, %s314
      %s316 = sphi 0, %s314
      %s317 = sphi 0, %s316
      %s331 = sphi 0, %s317
      %s337 = sphi 0, %s339
      %s340 = sphi 0, %s337
      %s341 = sphi 0, %s340
      %s357 = sphi 0, %s341
    $region4: #{conv_down_normal_forward_nhwc.1} parent=1 // loop_header_branch
      %26 = sbr.rel (%p24) target = $region8
    $region5: #{conv_down_normal_forward_nhwc.1} parent=1 // loop_body
      %s28 = ssub.s32 %s23, 1
      %s29 = ssub.s32 %s23, 2
      %s30 = sadd.s32 %s23, 1
      %s31 = ssub.s32 %s23, %s30
      %p32 = scmp.eq.s32.totalorder %s31, 0
      %s34 = sadd.s32 %s33, 1
      %s35 = scalar_select %p32, %s33, %s34
      %p38 = pneg %p32
      %p39 = scmp.eq.s32.totalorder %s23, 1
      %p40 = por %p38, %p39
      %p41 = scmp.ne.s32.totalorder %s33, %s36
      %p42 = scmp.eq.s32.totalorder %s23, 0
      %p43 = por %p41, %p42
      %p44 = scmp.ne.s32.totalorder %s33, %s36
      %p45 = scmp.eq.s32.totalorder %s28, 1
      %p46 = por %p44, %p45
      %p47 = scmp.ne.s32.totalorder %s36, %s37
      %p48 = scmp.eq.s32.totalorder %s28, 0
      %p49 = por %p47, %p48
      %p50 = scmp.ne.s32.totalorder %s36, %s37
      %p51 = scmp.eq.s32.totalorder %s29, 1
      %p52 = por %p50, %p51
      %p54 = scmp.ne.s32.totalorder %s37, %s53
      %p55 = scmp.eq.s32.totalorder %s29, 0
      %p56 = por %p54, %p55
      %s57 = ssub.s32 %s23, %s30
      %p58 = scmp.eq.s32.totalorder %s57, 0
      %s60 = sadd.s32 %s59, 1
      %s61 = scalar_select %p58, %s59, %s60
      %p64 = pneg %p58
      %p65 = scmp.eq.s32.totalorder %s23, 1
      %p66 = por %p64, %p65
      %p67 = scmp.ne.s32.totalorder %s59, %s62
      %p68 = scmp.eq.s32.totalorder %s23, 0
      %p69 = por %p67, %p68
      %p70 = scmp.ne.s32.totalorder %s59, %s62
      %p71 = scmp.eq.s32.totalorder %s28, 1
      %p72 = por %p70, %p71
      %p73 = scmp.ne.s32.totalorder %s62, %s63
      %p74 = scmp.eq.s32.totalorder %s28, 0
      %p75 = por %p73, %p74
      %p76 = scmp.ne.s32.totalorder %s62, %s63
      %p77 = scmp.eq.s32.totalorder %s29, 1
      %p78 = por %p76, %p77
      %p80 = scmp.ne.s32.totalorder %s63, %s79
      %p81 = scmp.eq.s32.totalorder %s29, 0
      %p82 = por %p80, %p81
      %s84 = sadd.s32 %s83, 1
      %p87 = scmp.eq.s32.totalorder %s23, 1
      %p88 = scmp.ne.s32.totalorder %s83, %s85
      %p89 = scmp.eq.s32.totalorder %s23, 0
      %p90 = por %p88, %p89
      %p91 = scmp.ne.s32.totalorder %s83, %s85
      %p92 = scmp.eq.s32.totalorder %s28, 1
      %p93 = por %p91, %p92
      %p94 = scmp.ne.s32.totalorder %s85, %s86
      %p95 = scmp.eq.s32.totalorder %s28, 0
      %p96 = por %p94, %p95
      %p97 = scmp.ne.s32.totalorder %s85, %s86
      %p98 = scmp.eq.s32.totalorder %s29, 1
      %p99 = por %p97, %p98
      %p101 = scmp.ne.s32.totalorder %s86, %s100
      %p102 = scmp.eq.s32.totalorder %s29, 0
      %p103 = por %p101, %p102
      %s105 = sadd.s32 %s104, 1
      %p108 = scmp.eq.s32.totalorder %s23, 1
      %p109 = scmp.ne.s32.totalorder %s104, %s106
      %p110 = scmp.eq.s32.totalorder %s23, 0
      %p111 = por %p109, %p110
      %p112 = scmp.ne.s32.totalorder %s104, %s106
      %p113 = scmp.eq.s32.totalorder %s28, 1
      %p114 = por %p112, %p113
      %p115 = scmp.ne.s32.totalorder %s106, %s107
      %p116 = scmp.eq.s32.totalorder %s28, 0
      %p117 = por %p115, %p116
      %p118 = scmp.ne.s32.totalorder %s106, %s107
      %p119 = scmp.eq.s32.totalorder %s29, 1
      %p120 = por %p118, %p119
      %p122 = scmp.ne.s32.totalorder %s107, %s121
      %p123 = scmp.eq.s32.totalorder %s29, 0
      %p124 = por %p122, %p123
      %s126 = sadd.s32 %s125, 1
      %p129 = scmp.eq.s32.totalorder %s23, 1
      %p130 = scmp.ne.s32.totalorder %s125, %s127
      %p131 = scmp.eq.s32.totalorder %s23, 0
      %p132 = por %p130, %p131
      %p133 = scmp.ne.s32.totalorder %s125, %s127
      %p134 = scmp.eq.s32.totalorder %s28, 1
      %p135 = por %p133, %p134
      %p136 = scmp.ne.s32.totalorder %s127, %s128
      %p137 = scmp.eq.s32.totalorder %s28, 0
      %p138 = por %p136, %p137
      %p139 = scmp.ne.s32.totalorder %s127, %s128
      %p140 = scmp.eq.s32.totalorder %s29, 1
      %p141 = por %p139, %p140
      %p143 = scmp.ne.s32.totalorder %s128, %s142
      %p144 = scmp.eq.s32.totalorder %s29, 0
      %p145 = por %p143, %p144
      %s147 = sadd.s32 %s146, 1
      %p150 = scmp.eq.s32.totalorder %s23, 1
      %p151 = scmp.ne.s32.totalorder %s146, %s148
      %p152 = scmp.eq.s32.totalorder %s23, 0
      %p153 = por %p151, %p152
      %p154 = scmp.ne.s32.totalorder %s146, %s148
      %p155 = scmp.eq.s32.totalorder %s28, 1
      %p156 = por %p154, %p155
      %p157 = scmp.ne.s32.totalorder %s148, %s149
      %p158 = scmp.eq.s32.totalorder %s28, 0
      %p159 = por %p157, %p158
      %p160 = scmp.ne.s32.totalorder %s148, %s149
      %p161 = scmp.eq.s32.totalorder %s29, 1
      %p162 = por %p160, %p161
      %p164 = scmp.ne.s32.totalorder %s149, %s163
      %p165 = scmp.eq.s32.totalorder %s29, 0
      %p166 = por %p164, %p165
      %s168 = sadd.s32 %s167, 1
      %p171 = scmp.eq.s32.totalorder %s23, 1
      %p172 = scmp.ne.s32.totalorder %s167, %s169
      %p173 = scmp.eq.s32.totalorder %s23, 0
      %p174 = por %p172, %p173
      %p175 = scmp.ne.s32.totalorder %s167, %s169
      %p176 = scmp.eq.s32.totalorder %s28, 1
      %p177 = por %p175, %p176
      %p178 = scmp.ne.s32.totalorder %s169, %s170
      %p179 = scmp.eq.s32.totalorder %s28, 0
      %p180 = por %p178, %p179
      %p181 = scmp.ne.s32.totalorder %s169, %s170
      %p182 = scmp.eq.s32.totalorder %s29, 1
      %p183 = por %p181, %p182
      %p185 = scmp.ne.s32.totalorder %s170, %s184
      %p186 = scmp.eq.s32.totalorder %s29, 0
      %p187 = por %p185, %p186
      %s189 = sadd.s32 %s188, 1
      %p192 = scmp.eq.s32.totalorder %s23, 1
      %p193 = scmp.ne.s32.totalorder %s188, %s190
      %p194 = scmp.eq.s32.totalorder %s23, 0
      %p195 = por %p193, %p194
      %p196 = scmp.ne.s32.totalorder %s188, %s190
      %p197 = scmp.eq.s32.totalorder %s28, 1
      %p198 = por %p196, %p197
      %p199 = scmp.ne.s32.totalorder %s190, %s191
      %p200 = scmp.eq.s32.totalorder %s28, 0
      %p201 = por %p199, %p200
      %p202 = scmp.ne.s32.totalorder %s190, %s191
      %p203 = scmp.eq.s32.totalorder %s29, 1
      %p204 = por %p202, %p203
      %p206 = scmp.ne.s32.totalorder %s191, %s205
      %p207 = scmp.eq.s32.totalorder %s29, 0
      %p208 = por %p206, %p207
      %s210 = sadd.s32 %s209, 1
      %p213 = scmp.eq.s32.totalorder %s23, 1
      %p214 = scmp.ne.s32.totalorder %s209, %s211
      %p215 = scmp.eq.s32.totalorder %s23, 0
      %p216 = por %p214, %p215
      %p217 = scmp.ne.s32.totalorder %s209, %s211
      %p218 = scmp.eq.s32.totalorder %s28, 1
      %p219 = por %p217, %p218
      %p220 = scmp.ne.s32.totalorder %s211, %s212
      %p221 = scmp.eq.s32.totalorder %s28, 0
      %p222 = por %p220, %p221
      %p223 = scmp.ne.s32.totalorder %s211, %s212
      %p224 = scmp.eq.s32.totalorder %s29, 1
      %p225 = por %p223, %p224
      %p227 = scmp.ne.s32.totalorder %s212, %s226
      %p228 = scmp.eq.s32.totalorder %s29, 0
      %p229 = por %p227, %p228
      %s231 = sadd.s32 %s230, 1
      %p234 = scmp.eq.s32.totalorder %s23, 1
      %p235 = scmp.ne.s32.totalorder %s230, %s232
      %p236 = scmp.eq.s32.totalorder %s23, 0
      %p237 = por %p235, %p236
      %p238 = scmp.ne.s32.totalorder %s230, %s232
      %p239 = scmp.eq.s32.totalorder %s28, 1
      %p240 = por %p238, %p239
      %p241 = scmp.ne.s32.totalorder %s232, %s233
      %p242 = scmp.eq.s32.totalorder %s28, 0
      %p243 = por %p241, %p242
      %p244 = scmp.ne.s32.totalorder %s232, %s233
      %p245 = scmp.eq.s32.totalorder %s29, 1
      %p246 = por %p244, %p245
      %p248 = scmp.ne.s32.totalorder %s233, %s247
      %p249 = scmp.eq.s32.totalorder %s29, 0
      %p250 = por %p248, %p249
      %s252 = sadd.s32 %s251, 1
      %p255 = scmp.eq.s32.totalorder %s23, 1
      %p256 = scmp.ne.s32.totalorder %s251, %s253
      %p257 = scmp.eq.s32.totalorder %s23, 0
      %p258 = por %p256, %p257
      %p259 = scmp.ne.s32.totalorder %s251, %s253
      %p260 = scmp.eq.s32.totalorder %s28, 1
      %p261 = por %p259, %p260
      %p262 = scmp.ne.s32.totalorder %s253, %s254
      %p263 = scmp.eq.s32.totalorder %s28, 0
      %p264 = por %p262, %p263
      %p265 = scmp.ne.s32.totalorder %s253, %s254
      %p266 = scmp.eq.s32.totalorder %s29, 1
      %p267 = por %p265, %p266
      %p269 = scmp.ne.s32.totalorder %s254, %s268
      %p270 = scmp.eq.s32.totalorder %s29, 0
      %p271 = por %p269, %p270
      %s273 = sadd.s32 %s272, 1
      %p276 = scmp.eq.s32.totalorder %s23, 1
      %p277 = scmp.ne.s32.totalorder %s272, %s274
      %p278 = scmp.eq.s32.totalorder %s23, 0
      %p279 = por %p277, %p278
      %p280 = scmp.ne.s32.totalorder %s272, %s274
      %p281 = scmp.eq.s32.totalorder %s28, 1
      %p282 = por %p280, %p281
      %p283 = scmp.ne.s32.totalorder %s274, %s275
      %p284 = scmp.eq.s32.totalorder %s28, 0
      %p285 = por %p283, %p284
      %p286 = scmp.ne.s32.totalorder %s274, %s275
      %p287 = scmp.eq.s32.totalorder %s29, 1
      %p288 = por %p286, %p287
      %p290 = scmp.ne.s32.totalorder %s275, %s289
      %p291 = scmp.eq.s32.totalorder %s29, 0
      %p292 = por %p290, %p291
      %s294 = sadd.s32 %s293, 1
      %p297 = scmp.eq.s32.totalorder %s23, 1
      %p298 = scmp.ne.s32.totalorder %s293, %s295
      %p299 = scmp.eq.s32.totalorder %s23, 0
      %p300 = por %p298, %p299
      %p301 = scmp.ne.s32.totalorder %s293, %s295
      %p302 = scmp.eq.s32.totalorder %s28, 1
      %p303 = por %p301, %p302
      %p304 = scmp.ne.s32.totalorder %s295, %s296
      %p305 = scmp.eq.s32.totalorder %s28, 0
      %p306 = por %p304, %p305
      %p307 = scmp.ne.s32.totalorder %s295, %s296
      %p308 = scmp.eq.s32.totalorder %s29, 1
      %p309 = por %p307, %p308
      %p311 = scmp.ne.s32.totalorder %s296, %s310
      %p312 = scmp.eq.s32.totalorder %s29, 0
      %p313 = por %p311, %p312
      %s315 = sadd.s32 %s314, 1
      %p318 = scmp.eq.s32.totalorder %s23, 1
      %p319 = scmp.ne.s32.totalorder %s314, %s316
      %p320 = scmp.eq.s32.totalorder %s23, 0
      %p321 = por %p319, %p320
      %p322 = scmp.ne.s32.totalorder %s314, %s316
      %p323 = scmp.eq.s32.totalorder %s28, 1
      %p324 = por %p322, %p323
      %p325 = scmp.ne.s32.totalorder %s316, %s317
      %p326 = scmp.eq.s32.totalorder %s28, 0
      %p327 = por %p325, %p326
      %p328 = scmp.ne.s32.totalorder %s316, %s317
      %p329 = scmp.eq.s32.totalorder %s29, 1
      %p330 = por %p328, %p329
      %p332 = scmp.ne.s32.totalorder %s317, %s331
      %p333 = scmp.eq.s32.totalorder %s29, 0
      %p334 = por %p332, %p333
      %s335 = ssub.s32 %s23, %s30
      %p336 = scmp.eq.s32.totalorder %s335, 0
      %s338 = sadd.s32 %s337, 1
      %s339 = scalar_select %p336, %s337, %s338
      %p342 = pneg %p336
      %p343 = scmp.eq.s32.totalorder %s23, 1
      %p344 = por %p342, %p343
      %p345 = scmp.ne.s32.totalorder %s337, %s340
      %p346 = scmp.eq.s32.totalorder %s23, 0
      %p347 = por %p345, %p346
      %p348 = scmp.ne.s32.totalorder %s337, %s340
      %p349 = scmp.eq.s32.totalorder %s28, 1
      %p350 = por %p348, %p349
      %p351 = scmp.ne.s32.totalorder %s340, %s341
      %p352 = scmp.eq.s32.totalorder %s28, 0
      %p353 = por %p351, %p352
      %p354 = scmp.ne.s32.totalorder %s340, %s341
      %p355 = scmp.eq.s32.totalorder %s29, 1
      %p356 = por %p354, %p355
      %p358 = scmp.ne.s32.totalorder %s341, %s357
      %p359 = scmp.eq.s32.totalorder %s29, 0
      %p360 = por %p358, %p359
      %p361 = scmp.le.s32.totalorder 1, %s23
      %p362 = scmp.lt.s32.totalorder %s23, 3
      %p363 = pnand %p361, %p362
      %p364 = pneg %p363
      // Predicated region
      $region9: #{conv_down_normal_forward_nhwc.1} parent=5 // pred_check
        _
      $region10: #{conv_down_normal_forward_nhwc.1} parent=5 // pred_check_branch
        %366 = sbr.rel (%p363) target = $region12
      $region11: #{conv_down_normal_forward_nhwc.1} parent=5 // pred_region
        %s367 = ssub.s32 %s23, 1
        // Predicated region
        $region13: #{conv_down_normal_forward_nhwc.1} parent=11 // pred_check
          %p368 = pneg %p96
        $region14: #{conv_down_normal_forward_nhwc.1} parent=11 // pred_check_branch
          %370 = sbr.rel (%p368) target = $region16
        $region15: #{conv_down_normal_forward_nhwc.1} parent=11 // pred_region
          _
        $region16: #{conv_down_normal_forward_nhwc.1} parent=11 // pred_fallthru
          _
        // Predicated region
        $region17: #{conv_down_normal_forward_nhwc.1} parent=11 // pred_check
          %p371 = pneg %p117
        $region18: #{conv_down_normal_forward_nhwc.1} parent=11 // pred_check_branch
          %373 = sbr.rel (%p371) target = $region20
        $region19: #{conv_down_normal_forward_nhwc.1} parent=11 // pred_region
          _
        $region20: #{conv_down_normal_forward_nhwc.1} parent=11 // pred_fallthru
          _
        // Predicated region
        $region21: #{conv_down_normal_forward_nhwc.1} parent=11 // pred_check
          %p374 = pneg %p138
        $region22: #{conv_down_normal_forward_nhwc.1} parent=11 // pred_check_branch
          %376 = sbr.rel (%p374) target = $region24
        $region23: #{conv_down_normal_forward_nhwc.1} parent=11 // pred_region
          _
        $region24: #{conv_down_normal_forward_nhwc.1} parent=11 // pred_fallthru
          _
        // Predicated region
        $region25: #{conv_down_normal_forward_nhwc.1} parent=11 // pred_check
          %p377 = pneg %p159
        $region26: #{conv_down_normal_forward_nhwc.1} parent=11 // pred_check_branch
          %379 = sbr.rel (%p377) target = $region28
        $region27: #{conv_down_normal_forward_nhwc.1} parent=11 // pred_region
          _
        $region28: #{conv_down_normal_forward_nhwc.1} parent=11 // pred_fallthru
          _
        // Predicated region
        $region29: #{conv_down_normal_forward_nhwc.1} parent=11 // pred_check
          %p380 = pneg %p180
        $region30: #{conv_down_normal_forward_nhwc.1} parent=11 // pred_check_branch
          %382 = sbr.rel (%p380) target = $region32
        $region31: #{conv_down_normal_forward_nhwc.1} parent=11 // pred_region
          _
        $region32: #{conv_down_normal_forward_nhwc.1} parent=11 // pred_fallthru
          _
        // Predicated region
        $region33: #{conv_down_normal_forward_nhwc.1} parent=11 // pred_check
          %p383 = pneg %p201
        $region34: #{conv_down_normal_forward_nhwc.1} parent=11 // pred_check_branch
          %385 = sbr.rel (%p383) target = $region36
        $region35: #{conv_down_normal_forward_nhwc.1} parent=11 // pred_region
          _
        $region36: #{conv_down_normal_forward_nhwc.1} parent=11 // pred_fallthru
          _
        // Predicated region
        $region37: #{conv_down_normal_forward_nhwc.1} parent=11 // pred_check
          %p386 = pneg %p222
        $region38: #{conv_down_normal_forward_nhwc.1} parent=11 // pred_check_branch
          %388 = sbr.rel (%p386) target = $region40
        $region39: #{conv_down_normal_forward_nhwc.1} parent=11 // pred_region
          _
        $region40: #{conv_down_normal_forward_nhwc.1} parent=11 // pred_fallthru
          _
        // Predicated region
        $region41: #{conv_down_normal_forward_nhwc.1} parent=11 // pred_check
          %p389 = pneg %p243
        $region42: #{conv_down_normal_forward_nhwc.1} parent=11 // pred_check_branch
          %391 = sbr.rel (%p389) target = $region44
        $region43: #{conv_down_normal_forward_nhwc.1} parent=11 // pred_region
          _
        $region44: #{conv_down_normal_forward_nhwc.1} parent=11 // pred_fallthru
          _
        // Predicated region
        $region45: #{conv_down_normal_forward_nhwc.1} parent=11 // pred_check
          %p392 = pneg %p264
        $region46: #{conv_down_normal_forward_nhwc.1} parent=11 // pred_check_branch
          %394 = sbr.rel (%p392) target = $region48
        $region47: #{conv_down_normal_forward_nhwc.1} parent=11 // pred_region
          _
        $region48: #{conv_down_normal_forward_nhwc.1} parent=11 // pred_fallthru
          _
        // Predicated region
        $region49: #{conv_down_normal_forward_nhwc.1} parent=11 // pred_check
          %p395 = pneg %p285
        $region50: #{conv_down_normal_forward_nhwc.1} parent=11 // pred_check_branch
          %397 = sbr.rel (%p395) target = $region52
        $region51: #{conv_down_normal_forward_nhwc.1} parent=11 // pred_region
          _
        $region52: #{conv_down_normal_forward_nhwc.1} parent=11 // pred_fallthru
          _
        // Predicated region
        $region53: #{conv_down_normal_forward_nhwc.1} parent=11 // pred_check
          %p398 = pneg %p306
        $region54: #{conv_down_normal_forward_nhwc.1} parent=11 // pred_check_branch
          %400 = sbr.rel (%p398) target = $region56
        $region55: #{conv_down_normal_forward_nhwc.1} parent=11 // pred_region
          _
        $region56: #{conv_down_normal_forward_nhwc.1} parent=11 // pred_fallthru
          _
        // Predicated region
        $region57: #{conv_down_normal_forward_nhwc.1} parent=11 // pred_check
          %p401 = pneg %p327
        $region58: #{conv_down_normal_forward_nhwc.1} parent=11 // pred_check_branch
          %403 = sbr.rel (%p401) target = $region60
        $region59: #{conv_down_normal_forward_nhwc.1} parent=11 // pred_region
          _
        $region60: #{conv_down_normal_forward_nhwc.1} parent=11 // pred_fallthru
          _
      $region12: #{conv_down_normal_forward_nhwc.1} parent=5 // pred_fallthru
        _
      %p404 = scmp.lt.s32.totalorder %s23, 2
      // Predicated region
      $region61: #{conv_down_normal_forward_nhwc.1} parent=5 // pred_check
        %p405 = pneg %p404
      $region62: #{conv_down_normal_forward_nhwc.1} parent=5 // pred_check_branch
        %407 = sbr.rel (%p405) target = $region64
      $region63: #{conv_down_normal_forward_nhwc.1} parent=5 // pred_region
        // Predicated region
        $region65: #{conv_down_normal_forward_nhwc.1} parent=63 // pred_check
          %p408 = pneg %p43
        $region66: #{conv_down_normal_forward_nhwc.1} parent=63 // pred_check_branch
          %410 = sbr.rel (%p408) target = $region68
        $region67: #{conv_down_normal_forward_nhwc.1} parent=63 // pred_region
          %p411 = scmp.lt.s32.totalorder %s23, 1
          %s412 = scalar_select %p411, %s23, 1
          %s413 = smul.addr %s412, 8
          %s414 = smul.addr %s413, 8
          %s415 = scalar_lea.vmem %s0, %s414
        $region68: #{conv_down_normal_forward_nhwc.1} parent=63 // pred_fallthru
          _
        // Predicated region
        $region69: #{conv_down_normal_forward_nhwc.1} parent=63 // pred_check
          %p416 = pneg %p69
        $region70: #{conv_down_normal_forward_nhwc.1} parent=63 // pred_check_branch
          %418 = sbr.rel (%p416) target = $region72
        $region71: #{conv_down_normal_forward_nhwc.1} parent=63 // pred_region
          %p419 = scmp.lt.s32.totalorder %s23, 1
          %s420 = scalar_select %p419, %s23, 1
          %s421 = smul.addr %s420, 8
          %s422 = smul.addr %s421, 8
          %s423 = scalar_lea.vmem %s1, %s422
        $region72: #{conv_down_normal_forward_nhwc.1} parent=63 // pred_fallthru
          _
      $region64: #{conv_down_normal_forward_nhwc.1} parent=5 // pred_fallthru
        _
      %p424 = scmp.le.s32.totalorder 1, %s23
      %p425 = scmp.lt.s32.totalorder %s23, 3
      %p426 = pnand %p424, %p425
      %p427 = pneg %p426
      // Predicated region
      $region73: #{conv_down_normal_forward_nhwc.1} parent=5 // pred_check
        _
      $region74: #{conv_down_normal_forward_nhwc.1} parent=5 // pred_check_branch
        %429 = sbr.rel (%p426) target = $region76
      $region75: #{conv_down_normal_forward_nhwc.1} parent=5 // pred_region
        %s430 = ssub.s32 %s23, 1
        %p431 = scmp.lt.s32.totalorder %s28, 1
        %s432 = scalar_select %p431, %s28, 1
        %s433 = smul.addr %s432, 8
        %s434 = smul.addr %s433, 8
        %s435 = scalar_lea.vmem %s0, %s434
        %p436 = pneg %p49
        %p437 = pneg %p46
        %p438 = scmp.lt.s32.totalorder %s28, 1
        %s439 = scalar_select %p438, %s28, 1
        %s440 = smul.addr %s439, 8
        %s441 = smul.addr %s440, 8
        %s442 = scalar_lea.vmem %s1, %s441
        %p443 = pneg %p75
        %p444 = pneg %p72
        %p445 = pneg %p96
        %p446 = pneg %p93
        %p447 = pneg %p117
        %p448 = pneg %p114
        %p449 = pneg %p138
        %p450 = pneg %p135
        %p451 = pneg %p159
        %p452 = pneg %p156
        %p453 = pneg %p180
        %p454 = pneg %p177
        %p455 = pneg %p201
        %p456 = pneg %p198
        %p457 = pneg %p222
        %p458 = pneg %p219
        %p459 = pneg %p243
        %p460 = pneg %p240
        %p461 = pneg %p264
        %p462 = pneg %p261
        %p463 = pneg %p285
        %p464 = pneg %p282
        %p465 = pneg %p306
        %p466 = pneg %p303
        %p467 = pneg %p327
        %p468 = pneg %p324
        %p469 = pneg %p353
        %p470 = pneg %p350
        %s471 = sand.u32 %s340, 1
        %s472 = scalar_lea.sflag [#allocation5], %s471
        %s473 = sand.u32 %s340, 1
        %s474 = smul.addr %s473, 64
        %s475 = scalar_lea.vmem [#allocation4], %s474
        %p476 = scmp.lt.s32.totalorder %s28, 1
        %s477 = scalar_select %p476, %s28, 1
        %s478 = smul.addr %s477, 8
        %s479 = smul.addr %s478, 8
        %s480 = scalar_lea.vmem %s0, %s479
        %p481 = scmp.lt.s32.totalorder %s28, 1
        %s482 = scalar_select %p481, %s28, 1
        %s483 = smul.addr %s482, 8
        %s484 = smul.addr %s483, 8
        %s485 = scalar_lea.vmem %s1, %s484
        %v487 = vld [vmem:[%s480] sm:$0xff]
        %v488 = vld [vmem:[%s480 + $0x8] sm:$0xff]
        %v489 = vld [vmem:[%s480 + $0x10] sm:$0xff]
        %v490 = vld [vmem:[%s480 + $0x18] sm:$0xff]
        %v491 = vld [vmem:[%s480 + $0x20] sm:$0xff]
        %v492 = vld [vmem:[%s480 + $0x28] sm:$0xff]
        %v493 = vld [vmem:[%s480 + $0x30] sm:$0xff]
        %v494 = vld [vmem:[%s480 + $0x38] sm:$0xff]
        %v495 = vpack.c.bf16 %v488, %v487
        %v496 = vpack.c.bf16 %v490, %v489
        %v497 = vpack.c.bf16 %v492, %v491
        %v498 = vpack.c.bf16 %v494, %v493
        %v499 = vld [vmem:[%s2] sm:$0xf]
        %v500 = vld [vmem:[%s2 + $0x4] sm:$0xf]
        %v503 = vunpack.c.l.b16 %v499
        %v504 = vunpack.c.l.b16 %v500
        %v505 = vpack.c.b16 %v504, %v503
        %vm507 = vcmask 130048
        %v509 = vsel %vm507, %v495, 0
        %v512 = vsel %vm507, %v496, 0
        %v515 = vsel %vm507, %v497, 0
        %v518 = vsel %vm507, %v498, 0
        %520 = vmatprep.subr.bf16.mxu0 0
        %521 = vmatpush1.bf16.msra.mxu0 0
        %522 = vmatprep.subr.bf16.mxu0 0
        %523 = vmatpush1.bf16.msra.mxu0 0
        %524 = vmatprep.subr.bf16.mxu0 0
        %525 = vmatpush1.bf16.msra.mxu0 0
        %526 = vmatprep.subr.bf16.mxu0 0
        %527 = vmatpush1.bf16.msra.mxu0 0
        %528 = vmatprep.subr.bf16.mxu0 0
        %529 = vmatpush1.bf16.msra.mxu0 0
        %530 = vmatprep.subr.bf16.mxu0 0
        %531 = vmatpush1.bf16.msra.mxu0 0
        %532 = vmatprep.subr.bf16.mxu0 0
        %533 = vmatpush1.bf16.msra.mxu0 0
        %534 = vmatprep.subr.bf16.mxu0 0
        %535 = vmatpush1.bf16.msra.mxu0 %v505
        %536 = vmatprep.subr.bf16.mxu0 0
        %537 = vmatpush2.bf16.msra.mxu0 0
        %538 = vmatprep.subr.bf16.mxu0 0
        %539 = vmatpush2.bf16.msra.mxu0 0
        %540 = vmatprep.subr.bf16.mxu0 0
        %541 = vmatpush2.bf16.msra.mxu0 0
        %542 = vmatprep.subr.bf16.mxu0 0
        %543 = vmatpush2.bf16.msra.mxu0 0
        %544 = vmatprep.subr.bf16.mxu0 0
        %545 = vmatpush2.bf16.msra.mxu0 0
        %546 = vmatprep.subr.bf16.mxu0 0
        %547 = vmatpush2.bf16.msra.mxu0 0
        %548 = vmatprep.subr.bf16.mxu0 0
        %549 = vmatpush2.bf16.msra.mxu0 0
        %550 = vmatprep.subr.bf16.mxu0 0
        %551 = vmatpush2.bf16.msra.mxu0 0
        %552 = vmatprep.mubr.bf16.mxu0 0
        %553 = vmatmul.mubr.bf16.gmra.mxu0 %v509
        %v554 = vpop.f32.mrf.mxu0
        %v555 = vadd.f32 0.0, %v554
        %v556 = vpop.f32.mrf.mxu0
        %v557 = vpop.f32.mrf.mxu0
        %v558 = vadd.f32 0.0, %v557
        %v559 = vpop.f32.mrf.mxu0
        %560 = vmatprep.mubr.bf16.mxu0 0
        %561 = vmatmul.mubr.bf16.gmra.mxu0 %v512
        %v562 = vpop.f32.mrf.mxu0
        %v563 = vadd.f32 0.0, %v562
        %v564 = vpop.f32.mrf.mxu0
        %v565 = vpop.f32.mrf.mxu0
        %v566 = vadd.f32 0.0, %v565
        %v567 = vpop.f32.mrf.mxu0
        %568 = vmatprep.mubr.bf16.mxu0 0
        %569 = vmatmul.mubr.bf16.gmra.mxu0 %v515
        %v570 = vpop.f32.mrf.mxu0
        %v571 = vadd.f32 0.0, %v570
        %v572 = vpop.f32.mrf.mxu0
        %v573 = vpop.f32.mrf.mxu0
        %v574 = vadd.f32 0.0, %v573
        %v575 = vpop.f32.mrf.mxu0
        %576 = vmatprep.mubr.bf16.mxu0 0
        %577 = vmatmul.mubr.bf16.gmra.mxu0 %v518
        %v578 = vpop.f32.mrf.mxu0
        %v579 = vadd.f32 0.0, %v578
        %v580 = vpop.f32.mrf.mxu0
        %v581 = vpop.f32.mrf.mxu0
        %v582 = vadd.f32 0.0, %v581
        %v583 = vpop.f32.mrf.mxu0
        %584 = vdwg.mxu0
        %v585 = vld [vmem:[%s3] sm:$0x1]
        %v587 = vlaneseq
        %v588 = vshrl.u32 %v587, 7
        %v589 = vsub.s32 0, %v588
        %v590 = vrot.slane %v585, %v589
        %v592 = vmul.f32 %v555, %v590
        %v593 = vmul.f32 %v558, %v590
        %v594 = vmul.f32 %v563, %v590
        %v595 = vmul.f32 %v566, %v590
        %v596 = vmul.f32 %v571, %v590
        %v597 = vmul.f32 %v574, %v590
        %v598 = vmul.f32 %v579, %v590
        %v599 = vmul.f32 %v582, %v590
        %v600 = vld [vmem:[%s4] sm:$0x1]
        %v602 = vlaneseq
        %v603 = vshrl.u32 %v602, 7
        %v604 = vsub.s32 0, %v603
        %v605 = vrot.slane %v600, %v604
        %v607 = vadd.f32 %v592, %v605
        %v608 = vadd.f32 %v593, %v605
        %v609 = vadd.f32 %v594, %v605
        %v610 = vadd.f32 %v595, %v605
        %v611 = vadd.f32 %v596, %v605
        %v612 = vadd.f32 %v597, %v605
        %v613 = vadd.f32 %v598, %v605
        %v614 = vadd.f32 %v599, %v605
        %v615 = vmax.f32 %v607, 0.0
        %v616 = vmax.f32 %v608, 0.0
        %v617 = vmax.f32 %v609, 0.0
        %v618 = vmax.f32 %v610, 0.0
        %v619 = vmax.f32 %v611, 0.0
        %v620 = vmax.f32 %v612, 0.0
        %v621 = vmax.f32 %v613, 0.0
        %v622 = vmax.f32 %v614, 0.0
        %623 = vst.msk [vmem:[#allocation2] sm:$0xff] %vm507, 0.0
        %vm624 = vcmask 123904
        %625 = vst.msk [vmem:[#allocation2 + $0x8] sm:$0x3] %vm624, 0.0
        %626 = vst.msk [vmem:[#allocation2 + $0x10] sm:$0xff] %vm507, 0.0
        %627 = vst.msk [vmem:[#allocation2 + $0x18] sm:$0x3] %vm624, 0.0
        %628 = vst.msk [vmem:[#allocation2 + $0x20] sm:$0xff] %vm507, 0.0
        %629 = vst.msk [vmem:[#allocation2 + $0x28] sm:$0x3] %vm624, 0.0
        %630 = vst.msk [vmem:[#allocation2 + $0x30] sm:$0xff] %vm507, 0.0
        %631 = vst.msk [vmem:[#allocation2 + $0x38] sm:$0x3] %vm624, 0.0
        %632 = vst.msk [vmem:[#allocation2 + $0x40] sm:$0xff] %vm507, 0.0
        %633 = vst.msk [vmem:[#allocation2 + $0x48] sm:$0x3] %vm624, 0.0
        %634 = vst.msk [vmem:[#allocation2 + $0x50] sm:$0xff] %vm507, 0.0
        %635 = vst.msk [vmem:[#allocation2 + $0x58] sm:$0x3] %vm624, 0.0
        %636 = vst.msk [vmem:[#allocation2 + $0x60] sm:$0xff] %vm507, 0.0
        %637 = vst.msk [vmem:[#allocation2 + $0x68] sm:$0x3] %vm624, 0.0
        %638 = vst.msk [vmem:[#allocation2 + $0x70] sm:$0xff] %vm507, 0.0
        %639 = vst.msk [vmem:[#allocation2 + $0x78] sm:$0x3] %vm624, 0.0
        %640 = vst.msk [vmem:[#allocation2 + $0x80] sm:$0xff] %vm507, 0.0
        %641 = vst.msk [vmem:[#allocation2 + $0x88] sm:$0x3] %vm624, 0.0
        %642 = vst.msk [vmem:[#allocation2 + $0x90] sm:$0xff] %vm507, 0.0
        %643 = vst.msk [vmem:[#allocation2 + $0x98] sm:$0x3] %vm624, 0.0
        %s644 = scalar_lea.vmem [#allocation2], 16
        %645 = vst.msk [vmem:[%s644 + $0x1] sm:$0xff] %vm507, %v615
        %646 = vst.msk [vmem:[%s644 + $0x11] sm:$0xff] %vm507, %v616
        %647 = vst.msk [vmem:[%s644 + $0x21] sm:$0xff] %vm507, %v617
        %648 = vst.msk [vmem:[%s644 + $0x31] sm:$0xff] %vm507, %v618
        %649 = vst.msk [vmem:[%s644 + $0x41] sm:$0xff] %vm507, %v619
        %650 = vst.msk [vmem:[%s644 + $0x51] sm:$0xff] %vm507, %v620
        %651 = vst.msk [vmem:[%s644 + $0x61] sm:$0xff] %vm507, %v621
        %652 = vst.msk [vmem:[%s644 + $0x71] sm:$0xff] %vm507, %v622
        %v653 = vld [vmem:[%s644 + $0x1] sm:$0xff]
        %v654 = vld [vmem:[%s644 + $0x11] sm:$0xff]
        %v655 = vld [vmem:[%s644 + $0x21] sm:$0xff]
        %v656 = vld [vmem:[%s644 + $0x31] sm:$0xff]
        %v657 = vld [vmem:[%s644 + $0x41] sm:$0xff]
        %v658 = vld [vmem:[%s644 + $0x51] sm:$0xff]
        %v659 = vld [vmem:[%s644 + $0x61] sm:$0xff]
        %v660 = vld [vmem:[%s644 + $0x71] sm:$0xff]
        %v661 = vpack.c.bf16 %v654, %v653
        %v662 = vpack.c.bf16 %v656, %v655
        %v663 = vpack.c.bf16 %v658, %v657
        %v664 = vpack.c.bf16 %v660, %v659
        %v665 = vld [vmem:[%s5] sm:$0xf]
        %v666 = vld [vmem:[%s5 + $0x4] sm:$0xf]
        %v667 = vld [vmem:[%s644] sm:$0xff]
        %v668 = vld [vmem:[%s644 + $0x10] sm:$0xff]
        %v669 = vld [vmem:[%s644 + $0x20] sm:$0xff]
        %v670 = vld [vmem:[%s644 + $0x30] sm:$0xff]
        %v671 = vld [vmem:[%s644 + $0x40] sm:$0xff]
        %v672 = vld [vmem:[%s644 + $0x50] sm:$0xff]
        %v673 = vld [vmem:[%s644 + $0x60] sm:$0xff]
        %v674 = vld [vmem:[%s644 + $0x70] sm:$0xff]
        %v675 = vpack.c.bf16 %v668, %v667
        %v676 = vpack.c.bf16 %v670, %v669
        %v677 = vpack.c.bf16 %v672, %v671
        %v678 = vpack.c.bf16 %v674, %v673
        %s679 = scalar_lea.vmem %s5, 8
        %v680 = vld [vmem:[%s679] sm:$0xf]
        %v681 = vld [vmem:[%s679 + $0x4] sm:$0xf]
        %v684 = vunpack.c.l.b16 %v680
        %v685 = vunpack.c.l.b16 %v681
        %v686 = vpack.c.b16 %v685, %v684
        %v689 = vsel %vm507, %v675, 0
        %v692 = vsel %vm507, %v676, 0
        %v695 = vsel %vm507, %v677, 0
        %v698 = vsel %vm507, %v678, 0
        %700 = vmatprep.subr.bf16.mxu0 0
        %701 = vmatpush1.bf16.msra.mxu0 0
        %702 = vmatprep.subr.bf16.mxu0 0
        %703 = vmatpush1.bf16.msra.mxu0 0
        %704 = vmatprep.subr.bf16.mxu0 0
        %705 = vmatpush1.bf16.msra.mxu0 0
        %706 = vmatprep.subr.bf16.mxu0 0
        %707 = vmatpush1.bf16.msra.mxu0 0
        %708 = vmatprep.subr.bf16.mxu0 0
        %709 = vmatpush1.bf16.msra.mxu0 0
        %710 = vmatprep.subr.bf16.mxu0 0
        %711 = vmatpush1.bf16.msra.mxu0 0
        %712 = vmatprep.subr.bf16.mxu0 0
        %713 = vmatpush1.bf16.msra.mxu0 0
        %714 = vmatprep.subr.bf16.mxu0 0
        %715 = vmatpush1.bf16.msra.mxu0 %v686
        %716 = vmatprep.subr.bf16.mxu0 0
        %717 = vmatpush2.bf16.msra.mxu0 0
        %718 = vmatprep.subr.bf16.mxu0 0
        %719 = vmatpush2.bf16.msra.mxu0 0
        %720 = vmatprep.subr.bf16.mxu0 0
        %721 = vmatpush2.bf16.msra.mxu0 0
        %722 = vmatprep.subr.bf16.mxu0 0
        %723 = vmatpush2.bf16.msra.mxu0 0
        %724 = vmatprep.subr.bf16.mxu0 0
        %725 = vmatpush2.bf16.msra.mxu0 0
        %726 = vmatprep.subr.bf16.mxu0 0
        %727 = vmatpush2.bf16.msra.mxu0 0
        %728 = vmatprep.subr.bf16.mxu0 0
        %729 = vmatpush2.bf16.msra.mxu0 0
        %730 = vmatprep.subr.bf16.mxu0 0
        %731 = vmatpush2.bf16.msra.mxu0 0
        %732 = vmatprep.mubr.bf16.mxu0 0
        %733 = vmatmul.mubr.bf16.gmra.mxu0 %v689
        %v734 = vpop.f32.mrf.mxu0
        %v735 = vadd.f32 0.0, %v734
        %v736 = vpop.f32.mrf.mxu0
        %v737 = vpop.f32.mrf.mxu0
        %v738 = vadd.f32 0.0, %v737
        %v739 = vpop.f32.mrf.mxu0
        %740 = vmatprep.mubr.bf16.mxu0 0
        %741 = vmatmul.mubr.bf16.gmra.mxu0 %v692
        %v742 = vpop.f32.mrf.mxu0
        %v743 = vadd.f32 0.0, %v742
        %v744 = vpop.f32.mrf.mxu0
        %v745 = vpop.f32.mrf.mxu0
        %v746 = vadd.f32 0.0, %v745
        %v747 = vpop.f32.mrf.mxu0
        %748 = vmatprep.mubr.bf16.mxu0 0
        %749 = vmatmul.mubr.bf16.gmra.mxu0 %v695
        %v750 = vpop.f32.mrf.mxu0
        %v751 = vadd.f32 0.0, %v750
        %v752 = vpop.f32.mrf.mxu0
        %v753 = vpop.f32.mrf.mxu0
        %v754 = vadd.f32 0.0, %v753
        %v755 = vpop.f32.mrf.mxu0
        %756 = vmatprep.mubr.bf16.mxu0 0
        %757 = vmatmul.mubr.bf16.gmra.mxu0 %v698
        %v758 = vpop.f32.mrf.mxu0
        %v759 = vadd.f32 0.0, %v758
        %v760 = vpop.f32.mrf.mxu0
        %v761 = vpop.f32.mrf.mxu0
        %v762 = vadd.f32 0.0, %v761
        %v763 = vpop.f32.mrf.mxu0
        %764 = vdwg.mxu0
        %v767 = vunpack.c.l.b16 %v665
        %v768 = vunpack.c.l.b16 %v666
        %v769 = vpack.c.b16 %v768, %v767
        %v772 = vsel %vm507, %v661, 0
        %v775 = vsel %vm507, %v662, 0
        %v778 = vsel %vm507, %v663, 0
        %v781 = vsel %vm507, %v664, 0
        %783 = vmatprep.subr.bf16.mxu0 0
        %784 = vmatpush1.bf16.msra.mxu0 0
        %785 = vmatprep.subr.bf16.mxu0 0
        %786 = vmatpush1.bf16.msra.mxu0 0
        %787 = vmatprep.subr.bf16.mxu0 0
        %788 = vmatpush1.bf16.msra.mxu0 0
        %789 = vmatprep.subr.bf16.mxu0 0
        %790 = vmatpush1.bf16.msra.mxu0 0
        %791 = vmatprep.subr.bf16.mxu0 0
        %792 = vmatpush1.bf16.msra.mxu0 0
        %793 = vmatprep.subr.bf16.mxu0 0
        %794 = vmatpush1.bf16.msra.mxu0 0
        %795 = vmatprep.subr.bf16.mxu0 0
        %796 = vmatpush1.bf16.msra.mxu0 0
        %797 = vmatprep.subr.bf16.mxu0 0
        %798 = vmatpush1.bf16.msra.mxu0 %v769
        %799 = vmatprep.subr.bf16.mxu0 0
        %800 = vmatpush2.bf16.msra.mxu0 0
        %801 = vmatprep.subr.bf16.mxu0 0
        %802 = vmatpush2.bf16.msra.mxu0 0
        %803 = vmatprep.subr.bf16.mxu0 0
        %804 = vmatpush2.bf16.msra.mxu0 0
        %805 = vmatprep.subr.bf16.mxu0 0
        %806 = vmatpush2.bf16.msra.mxu0 0
        %807 = vmatprep.subr.bf16.mxu0 0
        %808 = vmatpush2.bf16.msra.mxu0 0
        %809 = vmatprep.subr.bf16.mxu0 0
        %810 = vmatpush2.bf16.msra.mxu0 0
        %811 = vmatprep.subr.bf16.mxu0 0
        %812 = vmatpush2.bf16.msra.mxu0 0
        %813 = vmatprep.subr.bf16.mxu0 0
        %814 = vmatpush2.bf16.msra.mxu0 0
        %815 = vmatprep.mubr.bf16.mxu0 0
        %816 = vmatmul.mubr.bf16.gmra.mxu0 %v772
        %v817 = vpop.f32.mrf.mxu0
        %v818 = vadd.f32 %v735, %v817
        %v819 = vpop.f32.mrf.mxu0
        %v820 = vpop.f32.mrf.mxu0
        %v821 = vadd.f32 %v738, %v820
        %v822 = vpop.f32.mrf.mxu0
        %823 = vmatprep.mubr.bf16.mxu0 0
        %824 = vmatmul.mubr.bf16.gmra.mxu0 %v775
        %v825 = vpop.f32.mrf.mxu0
        %v826 = vadd.f32 %v743, %v825
        %v827 = vpop.f32.mrf.mxu0
        %v828 = vpop.f32.mrf.mxu0
        %v829 = vadd.f32 %v746, %v828
        %v830 = vpop.f32.mrf.mxu0
        %831 = vmatprep.mubr.bf16.mxu0 0
        %832 = vmatmul.mubr.bf16.gmra.mxu0 %v778
        %v833 = vpop.f32.mrf.mxu0
        %v834 = vadd.f32 %v751, %v833
        %v835 = vpop.f32.mrf.mxu0
        %v836 = vpop.f32.mrf.mxu0
        %v837 = vadd.f32 %v754, %v836
        %v838 = vpop.f32.mrf.mxu0
        %839 = vmatprep.mubr.bf16.mxu0 0
        %840 = vmatmul.mubr.bf16.gmra.mxu0 %v781
        %v841 = vpop.f32.mrf.mxu0
        %v842 = vadd.f32 %v759, %v841
        %v843 = vpop.f32.mrf.mxu0
        %v844 = vpop.f32.mrf.mxu0
        %v845 = vadd.f32 %v762, %v844
        %v846 = vpop.f32.mrf.mxu0
        %847 = vdwg.mxu0
        %v848 = vld [vmem:[#allocation2 + $0x1] sm:$0xff]
        %v849 = vld [vmem:[#allocation2 + $0x11] sm:$0xff]
        %v850 = vld [vmem:[#allocation2 + $0x21] sm:$0xff]
        %v851 = vld [vmem:[#allocation2 + $0x31] sm:$0xff]
        %v852 = vld [vmem:[#allocation2 + $0x41] sm:$0xff]
        %v853 = vld [vmem:[#allocation2 + $0x51] sm:$0xff]
        %v854 = vld [vmem:[#allocation2 + $0x61] sm:$0xff]
        %v855 = vld [vmem:[#allocation2 + $0x71] sm:$0xff]
        %v856 = vpack.c.bf16 %v849, %v848
        %v857 = vpack.c.bf16 %v851, %v850
        %v858 = vpack.c.bf16 %v853, %v852
        %v859 = vpack.c.bf16 %v855, %v854
        %s860 = scalar_lea.vmem %s5, 16
        %v861 = vld [vmem:[%s860] sm:$0xf]
        %v862 = vld [vmem:[%s860 + $0x4] sm:$0xf]
        %v865 = vunpack.c.l.b16 %v861
        %v866 = vunpack.c.l.b16 %v862
        %v867 = vpack.c.b16 %v866, %v865
        %v870 = vsel %vm507, %v856, 0
        %v873 = vsel %vm507, %v857, 0
        %v876 = vsel %vm507, %v858, 0
        %v879 = vsel %vm507, %v859, 0
        %881 = vmatprep.subr.bf16.mxu0 0
        %882 = vmatpush1.bf16.msra.mxu0 0
        %883 = vmatprep.subr.bf16.mxu0 0
        %884 = vmatpush1.bf16.msra.mxu0 0
        %885 = vmatprep.subr.bf16.mxu0 0
        %886 = vmatpush1.bf16.msra.mxu0 0
        %887 = vmatprep.subr.bf16.mxu0 0
        %888 = vmatpush1.bf16.msra.mxu0 0
        %889 = vmatprep.subr.bf16.mxu0 0
        %890 = vmatpush1.bf16.msra.mxu0 0
        %891 = vmatprep.subr.bf16.mxu0 0
        %892 = vmatpush1.bf16.msra.mxu0 0
        %893 = vmatprep.subr.bf16.mxu0 0
        %894 = vmatpush1.bf16.msra.mxu0 0
        %895 = vmatprep.subr.bf16.mxu0 0
        %896 = vmatpush1.bf16.msra.mxu0 %v867
        %897 = vmatprep.subr.bf16.mxu0 0
        %898 = vmatpush2.bf16.msra.mxu0 0
        %899 = vmatprep.subr.bf16.mxu0 0
        %900 = vmatpush2.bf16.msra.mxu0 0
        %901 = vmatprep.subr.bf16.mxu0 0
        %902 = vmatpush2.bf16.msra.mxu0 0
        %903 = vmatprep.subr.bf16.mxu0 0
        %904 = vmatpush2.bf16.msra.mxu0 0
        %905 = vmatprep.subr.bf16.mxu0 0
        %906 = vmatpush2.bf16.msra.mxu0 0
        %907 = vmatprep.subr.bf16.mxu0 0
        %908 = vmatpush2.bf16.msra.mxu0 0
        %909 = vmatprep.subr.bf16.mxu0 0
        %910 = vmatpush2.bf16.msra.mxu0 0
        %911 = vmatprep.subr.bf16.mxu0 0
        %912 = vmatpush2.bf16.msra.mxu0 0
        %913 = vmatprep.mubr.bf16.mxu0 0
        %914 = vmatmul.mubr.bf16.gmra.mxu0 %v870
        %v915 = vpop.f32.mrf.mxu0
        %v916 = vadd.f32 0.0, %v915
        %v917 = vpop.f32.mrf.mxu0
        %v918 = vpop.f32.mrf.mxu0
        %v919 = vadd.f32 0.0, %v918
        %v920 = vpop.f32.mrf.mxu0
        %921 = vmatprep.mubr.bf16.mxu0 0
        %922 = vmatmul.mubr.bf16.gmra.mxu0 %v873
        %v923 = vpop.f32.mrf.mxu0
        %v924 = vadd.f32 0.0, %v923
        %v925 = vpop.f32.mrf.mxu0
        %v926 = vpop.f32.mrf.mxu0
        %v927 = vadd.f32 0.0, %v926
        %v928 = vpop.f32.mrf.mxu0
        %929 = vmatprep.mubr.bf16.mxu0 0
        %930 = vmatmul.mubr.bf16.gmra.mxu0 %v876
        %v931 = vpop.f32.mrf.mxu0
        %v932 = vadd.f32 0.0, %v931
        %v933 = vpop.f32.mrf.mxu0
        %v934 = vpop.f32.mrf.mxu0
        %v935 = vadd.f32 0.0, %v934
        %v936 = vpop.f32.mrf.mxu0
        %937 = vmatprep.mubr.bf16.mxu0 0
        %938 = vmatmul.mubr.bf16.gmra.mxu0 %v879
        %v939 = vpop.f32.mrf.mxu0
        %v940 = vadd.f32 0.0, %v939
        %v941 = vpop.f32.mrf.mxu0
        %v942 = vpop.f32.mrf.mxu0
        %v943 = vadd.f32 0.0, %v942
        %v944 = vpop.f32.mrf.mxu0
        %945 = vdwg.mxu0
        %v946 = vadd.f32 %v818, %v916
        %v947 = vadd.f32 %v821, %v919
        %v948 = vadd.f32 %v826, %v924
        %v949 = vadd.f32 %v829, %v927
        %v950 = vadd.f32 %v834, %v932
        %v951 = vadd.f32 %v837, %v935
        %v952 = vadd.f32 %v842, %v940
        %v953 = vadd.f32 %v845, %v943
        %v954 = vld [vmem:[#allocation2] sm:$0xff]
        %v955 = vld [vmem:[#allocation2 + $0x10] sm:$0xff]
        %v956 = vld [vmem:[#allocation2 + $0x20] sm:$0xff]
        %v957 = vld [vmem:[#allocation2 + $0x30] sm:$0xff]
        %v958 = vld [vmem:[#allocation2 + $0x40] sm:$0xff]
        %v959 = vld [vmem:[#allocation2 + $0x50] sm:$0xff]
        %v960 = vld [vmem:[#allocation2 + $0x60] sm:$0xff]
        %v961 = vld [vmem:[#allocation2 + $0x70] sm:$0xff]
        %v962 = vpack.c.bf16 %v955, %v954
        %v963 = vpack.c.bf16 %v957, %v956
        %v964 = vpack.c.bf16 %v959, %v958
        %v965 = vpack.c.bf16 %v961, %v960
        %s966 = scalar_lea.vmem %s5, 24
        %v967 = vld [vmem:[%s966] sm:$0xf]
        %v968 = vld [vmem:[%s966 + $0x4] sm:$0xf]
        %v971 = vunpack.c.l.b16 %v967
        %v972 = vunpack.c.l.b16 %v968
        %v973 = vpack.c.b16 %v972, %v971
        %v976 = vsel %vm507, %v962, 0
        %v979 = vsel %vm507, %v963, 0
        %v982 = vsel %vm507, %v964, 0
        %v985 = vsel %vm507, %v965, 0
        %987 = vmatprep.subr.bf16.mxu0 0
        %988 = vmatpush1.bf16.msra.mxu0 0
        %989 = vmatprep.subr.bf16.mxu0 0
        %990 = vmatpush1.bf16.msra.mxu0 0
        %991 = vmatprep.subr.bf16.mxu0 0
        %992 = vmatpush1.bf16.msra.mxu0 0
        %993 = vmatprep.subr.bf16.mxu0 0
        %994 = vmatpush1.bf16.msra.mxu0 0
        %995 = vmatprep.subr.bf16.mxu0 0
        %996 = vmatpush1.bf16.msra.mxu0 0
        %997 = vmatprep.subr.bf16.mxu0 0
        %998 = vmatpush1.bf16.msra.mxu0 0
        %999 = vmatprep.subr.bf16.mxu0 0
        %1000 = vmatpush1.bf16.msra.mxu0 0
        %1001 = vmatprep.subr.bf16.mxu0 0
        %1002 = vmatpush1.bf16.msra.mxu0 %v973
        %1003 = vmatprep.subr.bf16.mxu0 0
        %1004 = vmatpush2.bf16.msra.mxu0 0
        %1005 = vmatprep.subr.bf16.mxu0 0
        %1006 = vmatpush2.bf16.msra.mxu0 0
        %1007 = vmatprep.subr.bf16.mxu0 0
        %1008 = vmatpush2.bf16.msra.mxu0 0
        %1009 = vmatprep.subr.bf16.mxu0 0
        %1010 = vmatpush2.bf16.msra.mxu0 0
        %1011 = vmatprep.subr.bf16.mxu0 0
        %1012 = vmatpush2.bf16.msra.mxu0 0
        %1013 = vmatprep.subr.bf16.mxu0 0
        %1014 = vmatpush2.bf16.msra.mxu0 0
        %1015 = vmatprep.subr.bf16.mxu0 0
        %1016 = vmatpush2.bf16.msra.mxu0 0
        %1017 = vmatprep.subr.bf16.mxu0 0
        %1018 = vmatpush2.bf16.msra.mxu0 0
        %1019 = vmatprep.mubr.bf16.mxu0 0
        %1020 = vmatmul.mubr.bf16.gmra.mxu0 %v976
        %v1021 = vpop.f32.mrf.mxu0
        %v1022 = vadd.f32 0.0, %v1021
        %v1023 = vpop.f32.mrf.mxu0
        %v1024 = vpop.f32.mrf.mxu0
        %v1025 = vadd.f32 0.0, %v1024
        %v1026 = vpop.f32.mrf.mxu0
        %1027 = vmatprep.mubr.bf16.mxu0 0
        %1028 = vmatmul.mubr.bf16.gmra.mxu0 %v979
        %v1029 = vpop.f32.mrf.mxu0
        %v1030 = vadd.f32 0.0, %v1029
        %v1031 = vpop.f32.mrf.mxu0
        %v1032 = vpop.f32.mrf.mxu0
        %v1033 = vadd.f32 0.0, %v1032
        %v1034 = vpop.f32.mrf.mxu0
        %1035 = vmatprep.mubr.bf16.mxu0 0
        %1036 = vmatmul.mubr.bf16.gmra.mxu0 %v982
        %v1037 = vpop.f32.mrf.mxu0
        %v1038 = vadd.f32 0.0, %v1037
        %v1039 = vpop.f32.mrf.mxu0
        %v1040 = vpop.f32.mrf.mxu0
        %v1041 = vadd.f32 0.0, %v1040
        %v1042 = vpop.f32.mrf.mxu0
        %1043 = vmatprep.mubr.bf16.mxu0 0
        %1044 = vmatmul.mubr.bf16.gmra.mxu0 %v985
        %v1045 = vpop.f32.mrf.mxu0
        %v1046 = vadd.f32 0.0, %v1045
        %v1047 = vpop.f32.mrf.mxu0
        %v1048 = vpop.f32.mrf.mxu0
        %v1049 = vadd.f32 0.0, %v1048
        %v1050 = vpop.f32.mrf.mxu0
        %1051 = vdwg.mxu0
        %v1052 = vadd.f32 %v946, %v1022
        %v1053 = vadd.f32 %v947, %v1025
        %v1054 = vadd.f32 %v948, %v1030
        %v1055 = vadd.f32 %v949, %v1033
        %v1056 = vadd.f32 %v950, %v1038
        %v1057 = vadd.f32 %v951, %v1041
        %v1058 = vadd.f32 %v952, %v1046
        %v1059 = vadd.f32 %v953, %v1049
        %v1060 = vld [vmem:[%s6] sm:$0x1]
        %v1062 = vlaneseq
        %v1063 = vshrl.u32 %v1062, 7
        %v1064 = vsub.s32 0, %v1063
        %v1065 = vrot.slane %v1060, %v1064
        %v1067 = vmul.f32 %v1052, %v1065
        %v1068 = vmul.f32 %v1053, %v1065
        %v1069 = vmul.f32 %v1054, %v1065
        %v1070 = vmul.f32 %v1055, %v1065
        %v1071 = vmul.f32 %v1056, %v1065
        %v1072 = vmul.f32 %v1057, %v1065
        %v1073 = vmul.f32 %v1058, %v1065
        %v1074 = vmul.f32 %v1059, %v1065
        %v1075 = vld [vmem:[%s7] sm:$0x1]
        %v1077 = vlaneseq
        %v1078 = vshrl.u32 %v1077, 7
        %v1079 = vsub.s32 0, %v1078
        %v1080 = vrot.slane %v1075, %v1079
        %v1082 = vadd.f32 %v1067, %v1080
        %v1083 = vadd.f32 %v1068, %v1080
        %v1084 = vadd.f32 %v1069, %v1080
        %v1085 = vadd.f32 %v1070, %v1080
        %v1086 = vadd.f32 %v1071, %v1080
        %v1087 = vadd.f32 %v1072, %v1080
        %v1088 = vadd.f32 %v1073, %v1080
        %v1089 = vadd.f32 %v1074, %v1080
        %v1090 = vmax.f32 %v1082, 0.0
        %v1091 = vmax.f32 %v1083, 0.0
        %v1092 = vmax.f32 %v1084, 0.0
        %v1093 = vmax.f32 %v1085, 0.0
        %v1094 = vmax.f32 %v1086, 0.0
        %v1095 = vmax.f32 %v1087, 0.0
        %v1096 = vmax.f32 %v1088, 0.0
        %v1097 = vmax.f32 %v1089, 0.0
        %v1098 = vld [vmem:[%s485] sm:$0xff]
        %v1099 = vld [vmem:[%s485 + $0x8] sm:$0xff]
        %v1100 = vld [vmem:[%s485 + $0x10] sm:$0xff]
        %v1101 = vld [vmem:[%s485 + $0x18] sm:$0xff]
        %v1102 = vld [vmem:[%s485 + $0x20] sm:$0xff]
        %v1103 = vld [vmem:[%s485 + $0x28] sm:$0xff]
        %v1104 = vld [vmem:[%s485 + $0x30] sm:$0xff]
        %v1105 = vld [vmem:[%s485 + $0x38] sm:$0xff]
        %v1106 = vpack.c.bf16 %v1099, %v1098
        %v1107 = vpack.c.bf16 %v1101, %v1100
        %v1108 = vpack.c.bf16 %v1103, %v1102
        %v1109 = vpack.c.bf16 %v1105, %v1104
        %v1110 = vld [vmem:[%s8] sm:$0xf]
        %vm1111 = vcmask 64512
        %v1113 = vsel %vm1111, %v1106, 0
        %v1116 = vsel %vm1111, %v1107, 0
        %v1119 = vsel %vm1111, %v1108, 0
        %v1122 = vsel %vm1111, %v1109, 0
        %vm1124 = vcmask 1043456
        %v1126 = vsel %vm1124, %v1110, 0
        %1128 = vmatprep.subr.bf16.mxu0 0
        %1129 = vmatpush1.bf16.msra.mxu0 0
        %1130 = vmatprep.subr.bf16.mxu0 0
        %1131 = vmatpush1.bf16.msra.mxu0 0
        %1132 = vmatprep.subr.bf16.mxu0 0
        %1133 = vmatpush1.bf16.msra.mxu0 0
        %1134 = vmatprep.subr.bf16.mxu0 0
        %1135 = vmatpush1.bf16.msra.mxu0 0
        %1136 = vmatprep.subr.bf16.mxu0 0
        %1137 = vmatpush1.bf16.msra.mxu0 0
        %1138 = vmatprep.subr.bf16.mxu0 0
        %1139 = vmatpush1.bf16.msra.mxu0 0
        %1140 = vmatprep.subr.bf16.mxu0 0
        %1141 = vmatpush1.bf16.msra.mxu0 0
        %1142 = vmatprep.subr.bf16.mxu0 0
        %1143 = vmatpush1.bf16.msra.mxu0 %v1126
        %1144 = vmatprep.subr.bf16.mxu0 0
        %1145 = vmatpush2.bf16.msra.mxu0 0
        %1146 = vmatprep.subr.bf16.mxu0 0
        %1147 = vmatpush2.bf16.msra.mxu0 0
        %1148 = vmatprep.subr.bf16.mxu0 0
        %1149 = vmatpush2.bf16.msra.mxu0 0
        %1150 = vmatprep.subr.bf16.mxu0 0
        %1151 = vmatpush2.bf16.msra.mxu0 0
        %1152 = vmatprep.subr.bf16.mxu0 0
        %1153 = vmatpush2.bf16.msra.mxu0 0
        %1154 = vmatprep.subr.bf16.mxu0 0
        %1155 = vmatpush2.bf16.msra.mxu0 0
        %1156 = vmatprep.subr.bf16.mxu0 0
        %1157 = vmatpush2.bf16.msra.mxu0 0
        %1158 = vmatprep.subr.bf16.mxu0 0
        %1159 = vmatpush2.bf16.msra.mxu0 0
        %1160 = vmatprep.mubr.bf16.mxu0 0
        %1161 = vmatmul.mubr.bf16.gmra.mxu0 %v1113
        %v1162 = vpop.f32.mrf.mxu0
        %v1163 = vadd.f32 0.0, %v1162
        %v1164 = vpop.f32.mrf.mxu0
        %v1165 = vpop.f32.mrf.mxu0
        %v1166 = vadd.f32 0.0, %v1165
        %v1167 = vpop.f32.mrf.mxu0
        %1168 = vmatprep.mubr.bf16.mxu0 0
        %1169 = vmatmul.mubr.bf16.gmra.mxu0 %v1116
        %v1170 = vpop.f32.mrf.mxu0
        %v1171 = vadd.f32 0.0, %v1170
        %v1172 = vpop.f32.mrf.mxu0
        %v1173 = vpop.f32.mrf.mxu0
        %v1174 = vadd.f32 0.0, %v1173
        %v1175 = vpop.f32.mrf.mxu0
        %1176 = vmatprep.mubr.bf16.mxu0 0
        %1177 = vmatmul.mubr.bf16.gmra.mxu0 %v1119
        %v1178 = vpop.f32.mrf.mxu0
        %v1179 = vadd.f32 0.0, %v1178
        %v1180 = vpop.f32.mrf.mxu0
        %v1181 = vpop.f32.mrf.mxu0
        %v1182 = vadd.f32 0.0, %v1181
        %v1183 = vpop.f32.mrf.mxu0
        %1184 = vmatprep.mubr.bf16.mxu0 0
        %1185 = vmatmul.mubr.bf16.gmra.mxu0 %v1122
        %v1186 = vpop.f32.mrf.mxu0
        %v1187 = vadd.f32 0.0, %v1186
        %v1188 = vpop.f32.mrf.mxu0
        %v1189 = vpop.f32.mrf.mxu0
        %v1190 = vadd.f32 0.0, %v1189
        %v1191 = vpop.f32.mrf.mxu0
        %1192 = vdwg.mxu0
        %v1193 = vld [vmem:[%s9] sm:$0x1]
        %v1195 = vlaneseq
        %v1196 = vshrl.u32 %v1195, 7
        %v1197 = vsub.s32 0, %v1196
        %v1198 = vrot.slane %v1193, %v1197
        %v1200 = vmul.f32 %v1163, %v1198
        %v1201 = vmul.f32 %v1166, %v1198
        %v1202 = vmul.f32 %v1171, %v1198
        %v1203 = vmul.f32 %v1174, %v1198
        %v1204 = vmul.f32 %v1179, %v1198
        %v1205 = vmul.f32 %v1182, %v1198
        %v1206 = vmul.f32 %v1187, %v1198
        %v1207 = vmul.f32 %v1190, %v1198
        %v1208 = vld [vmem:[%s10] sm:$0x1]
        %v1210 = vlaneseq
        %v1211 = vshrl.u32 %v1210, 7
        %v1212 = vsub.s32 0, %v1211
        %v1213 = vrot.slane %v1208, %v1212
        %v1215 = vadd.f32 %v1200, %v1213
        %v1216 = vadd.f32 %v1201, %v1213
        %v1217 = vadd.f32 %v1202, %v1213
        %v1218 = vadd.f32 %v1203, %v1213
        %v1219 = vadd.f32 %v1204, %v1213
        %v1220 = vadd.f32 %v1205, %v1213
        %v1221 = vadd.f32 %v1206, %v1213
        %v1222 = vadd.f32 %v1207, %v1213
        %v1223 = vmax.f32 %v1215, 0.0
        %v1224 = vmax.f32 %v1216, 0.0
        %v1225 = vmax.f32 %v1217, 0.0
        %v1226 = vmax.f32 %v1218, 0.0
        %v1227 = vmax.f32 %v1219, 0.0
        %v1228 = vmax.f32 %v1220, 0.0
        %v1229 = vmax.f32 %v1221, 0.0
        %v1230 = vmax.f32 %v1222, 0.0
        %1231 = vst.msk [vmem:[#allocation3] sm:$0xff] %vm1111, 0.0
        %vm1232 = vcmask 58368
        %1233 = vst.msk [vmem:[#allocation3 + $0x8] sm:$0x3] %vm1232, 0.0
        %1234 = vst.msk [vmem:[#allocation3 + $0x10] sm:$0xff] %vm1111, 0.0
        %1235 = vst.msk [vmem:[#allocation3 + $0x18] sm:$0x3] %vm1232, 0.0
        %1236 = vst.msk [vmem:[#allocation3 + $0x20] sm:$0xff] %vm1111, 0.0
        %1237 = vst.msk [vmem:[#allocation3 + $0x28] sm:$0x3] %vm1232, 0.0
        %1238 = vst.msk [vmem:[#allocation3 + $0x30] sm:$0xff] %vm1111, 0.0
        %1239 = vst.msk [vmem:[#allocation3 + $0x38] sm:$0x3] %vm1232, 0.0
        %1240 = vst.msk [vmem:[#allocation3 + $0x40] sm:$0xff] %vm1111, 0.0
        %1241 = vst.msk [vmem:[#allocation3 + $0x48] sm:$0x3] %vm1232, 0.0
        %1242 = vst.msk [vmem:[#allocation3 + $0x50] sm:$0xff] %vm1111, 0.0
        %1243 = vst.msk [vmem:[#allocation3 + $0x58] sm:$0x3] %vm1232, 0.0
        %1244 = vst.msk [vmem:[#allocation3 + $0x60] sm:$0xff] %vm1111, 0.0
        %1245 = vst.msk [vmem:[#allocation3 + $0x68] sm:$0x3] %vm1232, 0.0
        %1246 = vst.msk [vmem:[#allocation3 + $0x70] sm:$0xff] %vm1111, 0.0
        %1247 = vst.msk [vmem:[#allocation3 + $0x78] sm:$0x3] %vm1232, 0.0
        %1248 = vst.msk [vmem:[#allocation3 + $0x80] sm:$0xff] %vm1111, 0.0
        %1249 = vst.msk [vmem:[#allocation3 + $0x88] sm:$0x3] %vm1232, 0.0
        %1250 = vst.msk [vmem:[#allocation3 + $0x90] sm:$0xff] %vm1111, 0.0
        %1251 = vst.msk [vmem:[#allocation3 + $0x98] sm:$0x3] %vm1232, 0.0
        %s1252 = scalar_lea.vmem [#allocation3], 16
        %1253 = vst.msk [vmem:[%s1252 + $0x1] sm:$0xff] %vm1111, %v1223
        %1254 = vst.msk [vmem:[%s1252 + $0x11] sm:$0xff] %vm1111, %v1224
        %1255 = vst.msk [vmem:[%s1252 + $0x21] sm:$0xff] %vm1111, %v1225
        %1256 = vst.msk [vmem:[%s1252 + $0x31] sm:$0xff] %vm1111, %v1226
        %1257 = vst.msk [vmem:[%s1252 + $0x41] sm:$0xff] %vm1111, %v1227
        %1258 = vst.msk [vmem:[%s1252 + $0x51] sm:$0xff] %vm1111, %v1228
        %1259 = vst.msk [vmem:[%s1252 + $0x61] sm:$0xff] %vm1111, %v1229
        %1260 = vst.msk [vmem:[%s1252 + $0x71] sm:$0xff] %vm1111, %v1230
        %v1261 = vld [vmem:[#allocation3] sm:$0xff]
        %v1262 = vld [vmem:[#allocation3 + $0x10] sm:$0xff]
        %v1263 = vld [vmem:[#allocation3 + $0x20] sm:$0xff]
        %v1264 = vld [vmem:[#allocation3 + $0x30] sm:$0xff]
        %v1265 = vld [vmem:[#allocation3 + $0x40] sm:$0xff]
        %v1266 = vld [vmem:[#allocation3 + $0x50] sm:$0xff]
        %v1267 = vld [vmem:[#allocation3 + $0x60] sm:$0xff]
        %v1268 = vld [vmem:[#allocation3 + $0x70] sm:$0xff]
        %v1269 = vpack.c.bf16 %v1262, %v1261
        %v1270 = vpack.c.bf16 %v1264, %v1263
        %v1271 = vpack.c.bf16 %v1266, %v1265
        %v1272 = vpack.c.bf16 %v1268, %v1267
        %v1273 = vld [vmem:[%s11] sm:$0xf]
        %v1274 = vld [vmem:[#allocation3 + $0x1] sm:$0xff]
        %v1275 = vld [vmem:[#allocation3 + $0x11] sm:$0xff]
        %v1276 = vld [vmem:[#allocation3 + $0x21] sm:$0xff]
        %v1277 = vld [vmem:[#allocation3 + $0x31] sm:$0xff]
        %v1278 = vld [vmem:[#allocation3 + $0x41] sm:$0xff]
        %v1279 = vld [vmem:[#allocation3 + $0x51] sm:$0xff]
        %v1280 = vld [vmem:[#allocation3 + $0x61] sm:$0xff]
        %v1281 = vld [vmem:[#allocation3 + $0x71] sm:$0xff]
        %v1282 = vpack.c.bf16 %v1275, %v1274
        %v1283 = vpack.c.bf16 %v1277, %v1276
        %v1284 = vpack.c.bf16 %v1279, %v1278
        %v1285 = vpack.c.bf16 %v1281, %v1280
        %s1286 = scalar_lea.vmem %s11, 4
        %v1287 = vld [vmem:[%s1286] sm:$0xf]
        %v1289 = vsel %vm1111, %v1282, 0
        %v1292 = vsel %vm1111, %v1283, 0
        %v1295 = vsel %vm1111, %v1284, 0
        %v1298 = vsel %vm1111, %v1285, 0
        %v1301 = vsel %vm1124, %v1287, 0
        %1303 = vmatprep.subr.bf16.mxu0 0
        %1304 = vmatpush1.bf16.msra.mxu0 0
        %1305 = vmatprep.subr.bf16.mxu0 0
        %1306 = vmatpush1.bf16.msra.mxu0 0
        %1307 = vmatprep.subr.bf16.mxu0 0
        %1308 = vmatpush1.bf16.msra.mxu0 0
        %1309 = vmatprep.subr.bf16.mxu0 0
        %1310 = vmatpush1.bf16.msra.mxu0 0
        %1311 = vmatprep.subr.bf16.mxu0 0
        %1312 = vmatpush1.bf16.msra.mxu0 0
        %1313 = vmatprep.subr.bf16.mxu0 0
        %1314 = vmatpush1.bf16.msra.mxu0 0
        %1315 = vmatprep.subr.bf16.mxu0 0
        %1316 = vmatpush1.bf16.msra.mxu0 0
        %1317 = vmatprep.subr.bf16.mxu0 0
        %1318 = vmatpush1.bf16.msra.mxu0 %v1301
        %1319 = vmatprep.subr.bf16.mxu0 0
        %1320 = vmatpush2.bf16.msra.mxu0 0
        %1321 = vmatprep.subr.bf16.mxu0 0
        %1322 = vmatpush2.bf16.msra.mxu0 0
        %1323 = vmatprep.subr.bf16.mxu0 0
        %1324 = vmatpush2.bf16.msra.mxu0 0
        %1325 = vmatprep.subr.bf16.mxu0 0
        %1326 = vmatpush2.bf16.msra.mxu0 0
        %1327 = vmatprep.subr.bf16.mxu0 0
        %1328 = vmatpush2.bf16.msra.mxu0 0
        %1329 = vmatprep.subr.bf16.mxu0 0
        %1330 = vmatpush2.bf16.msra.mxu0 0
        %1331 = vmatprep.subr.bf16.mxu0 0
        %1332 = vmatpush2.bf16.msra.mxu0 0
        %1333 = vmatprep.subr.bf16.mxu0 0
        %1334 = vmatpush2.bf16.msra.mxu0 0
        %1335 = vmatprep.mubr.bf16.mxu0 0
        %1336 = vmatmul.mubr.bf16.gmra.mxu0 %v1289
        %v1337 = vpop.f32.mrf.mxu0
        %v1338 = vadd.f32 0.0, %v1337
        %v1339 = vpop.f32.mrf.mxu0
        %v1340 = vpop.f32.mrf.mxu0
        %v1341 = vadd.f32 0.0, %v1340
        %v1342 = vpop.f32.mrf.mxu0
        %1343 = vmatprep.mubr.bf16.mxu0 0
        %1344 = vmatmul.mubr.bf16.gmra.mxu0 %v1292
        %v1345 = vpop.f32.mrf.mxu0
        %v1346 = vadd.f32 0.0, %v1345
        %v1347 = vpop.f32.mrf.mxu0
        %v1348 = vpop.f32.mrf.mxu0
        %v1349 = vadd.f32 0.0, %v1348
        %v1350 = vpop.f32.mrf.mxu0
        %1351 = vmatprep.mubr.bf16.mxu0 0
        %1352 = vmatmul.mubr.bf16.gmra.mxu0 %v1295
        %v1353 = vpop.f32.mrf.mxu0
        %v1354 = vadd.f32 0.0, %v1353
        %v1355 = vpop.f32.mrf.mxu0
        %v1356 = vpop.f32.mrf.mxu0
        %v1357 = vadd.f32 0.0, %v1356
        %v1358 = vpop.f32.mrf.mxu0
        %1359 = vmatprep.mubr.bf16.mxu0 0
        %1360 = vmatmul.mubr.bf16.gmra.mxu0 %v1298
        %v1361 = vpop.f32.mrf.mxu0
        %v1362 = vadd.f32 0.0, %v1361
        %v1363 = vpop.f32.mrf.mxu0
        %v1364 = vpop.f32.mrf.mxu0
        %v1365 = vadd.f32 0.0, %v1364
        %v1366 = vpop.f32.mrf.mxu0
        %1367 = vdwg.mxu0
        %v1369 = vsel %vm1111, %v1269, 0
        %v1372 = vsel %vm1111, %v1270, 0
        %v1375 = vsel %vm1111, %v1271, 0
        %v1378 = vsel %vm1111, %v1272, 0
        %v1381 = vsel %vm1124, %v1273, 0
        %1383 = vmatprep.subr.bf16.mxu0 0
        %1384 = vmatpush1.bf16.msra.mxu0 0
        %1385 = vmatprep.subr.bf16.mxu0 0
        %1386 = vmatpush1.bf16.msra.mxu0 0
        %1387 = vmatprep.subr.bf16.mxu0 0
        %1388 = vmatpush1.bf16.msra.mxu0 0
        %1389 = vmatprep.subr.bf16.mxu0 0
        %1390 = vmatpush1.bf16.msra.mxu0 0
        %1391 = vmatprep.subr.bf16.mxu0 0
        %1392 = vmatpush1.bf16.msra.mxu0 0
        %1393 = vmatprep.subr.bf16.mxu0 0
        %1394 = vmatpush1.bf16.msra.mxu0 0
        %1395 = vmatprep.subr.bf16.mxu0 0
        %1396 = vmatpush1.bf16.msra.mxu0 0
        %1397 = vmatprep.subr.bf16.mxu0 0
        %1398 = vmatpush1.bf16.msra.mxu0 %v1381
        %1399 = vmatprep.subr.bf16.mxu0 0
        %1400 = vmatpush2.bf16.msra.mxu0 0
        %1401 = vmatprep.subr.bf16.mxu0 0
        %1402 = vmatpush2.bf16.msra.mxu0 0
        %1403 = vmatprep.subr.bf16.mxu0 0
        %1404 = vmatpush2.bf16.msra.mxu0 0
        %1405 = vmatprep.subr.bf16.mxu0 0
        %1406 = vmatpush2.bf16.msra.mxu0 0
        %1407 = vmatprep.subr.bf16.mxu0 0
        %1408 = vmatpush2.bf16.msra.mxu0 0
        %1409 = vmatprep.subr.bf16.mxu0 0
        %1410 = vmatpush2.bf16.msra.mxu0 0
        %1411 = vmatprep.subr.bf16.mxu0 0
        %1412 = vmatpush2.bf16.msra.mxu0 0
        %1413 = vmatprep.subr.bf16.mxu0 0
        %1414 = vmatpush2.bf16.msra.mxu0 0
        %1415 = vmatprep.mubr.bf16.mxu0 0
        %1416 = vmatmul.mubr.bf16.gmra.mxu0 %v1369
        %v1417 = vpop.f32.mrf.mxu0
        %v1418 = vadd.f32 %v1338, %v1417
        %v1419 = vpop.f32.mrf.mxu0
        %v1420 = vpop.f32.mrf.mxu0
        %v1421 = vadd.f32 %v1341, %v1420
        %v1422 = vpop.f32.mrf.mxu0
        %1423 = vmatprep.mubr.bf16.mxu0 0
        %1424 = vmatmul.mubr.bf16.gmra.mxu0 %v1372
        %v1425 = vpop.f32.mrf.mxu0
        %v1426 = vadd.f32 %v1346, %v1425
        %v1427 = vpop.f32.mrf.mxu0
        %v1428 = vpop.f32.mrf.mxu0
        %v1429 = vadd.f32 %v1349, %v1428
        %v1430 = vpop.f32.mrf.mxu0
        %1431 = vmatprep.mubr.bf16.mxu0 0
        %1432 = vmatmul.mubr.bf16.gmra.mxu0 %v1375
        %v1433 = vpop.f32.mrf.mxu0
        %v1434 = vadd.f32 %v1354, %v1433
        %v1435 = vpop.f32.mrf.mxu0
        %v1436 = vpop.f32.mrf.mxu0
        %v1437 = vadd.f32 %v1357, %v1436
        %v1438 = vpop.f32.mrf.mxu0
        %1439 = vmatprep.mubr.bf16.mxu0 0
        %1440 = vmatmul.mubr.bf16.gmra.mxu0 %v1378
        %v1441 = vpop.f32.mrf.mxu0
        %v1442 = vadd.f32 %v1362, %v1441
        %v1443 = vpop.f32.mrf.mxu0
        %v1444 = vpop.f32.mrf.mxu0
        %v1445 = vadd.f32 %v1365, %v1444
        %v1446 = vpop.f32.mrf.mxu0
        %1447 = vdwg.mxu0
        %v1448 = vld [vmem:[#allocation3 + $0x2] sm:$0xff]
        %v1449 = vld [vmem:[#allocation3 + $0x12] sm:$0xff]
        %v1450 = vld [vmem:[#allocation3 + $0x22] sm:$0xff]
        %v1451 = vld [vmem:[#allocation3 + $0x32] sm:$0xff]
        %v1452 = vld [vmem:[#allocation3 + $0x42] sm:$0xff]
        %v1453 = vld [vmem:[#allocation3 + $0x52] sm:$0xff]
        %v1454 = vld [vmem:[#allocation3 + $0x62] sm:$0xff]
        %v1455 = vld [vmem:[#allocation3 + $0x72] sm:$0xff]
        %v1456 = vpack.c.bf16 %v1449, %v1448
        %v1457 = vpack.c.bf16 %v1451, %v1450
        %v1458 = vpack.c.bf16 %v1453, %v1452
        %v1459 = vpack.c.bf16 %v1455, %v1454
        %s1460 = scalar_lea.vmem %s11, 8
        %v1461 = vld [vmem:[%s1460] sm:$0xf]
        %v1463 = vsel %vm1111, %v1456, 0
        %v1466 = vsel %vm1111, %v1457, 0
        %v1469 = vsel %vm1111, %v1458, 0
        %v1472 = vsel %vm1111, %v1459, 0
        %v1475 = vsel %vm1124, %v1461, 0
        %1477 = vmatprep.subr.bf16.mxu0 0
        %1478 = vmatpush1.bf16.msra.mxu0 0
        %1479 = vmatprep.subr.bf16.mxu0 0
        %1480 = vmatpush1.bf16.msra.mxu0 0
        %1481 = vmatprep.subr.bf16.mxu0 0
        %1482 = vmatpush1.bf16.msra.mxu0 0
        %1483 = vmatprep.subr.bf16.mxu0 0
        %1484 = vmatpush1.bf16.msra.mxu0 0
        %1485 = vmatprep.subr.bf16.mxu0 0
        %1486 = vmatpush1.bf16.msra.mxu0 0
        %1487 = vmatprep.subr.bf16.mxu0 0
        %1488 = vmatpush1.bf16.msra.mxu0 0
        %1489 = vmatprep.subr.bf16.mxu0 0
        %1490 = vmatpush1.bf16.msra.mxu0 0
        %1491 = vmatprep.subr.bf16.mxu0 0
        %1492 = vmatpush1.bf16.msra.mxu0 %v1475
        %1493 = vmatprep.subr.bf16.mxu0 0
        %1494 = vmatpush2.bf16.msra.mxu0 0
        %1495 = vmatprep.subr.bf16.mxu0 0
        %1496 = vmatpush2.bf16.msra.mxu0 0
        %1497 = vmatprep.subr.bf16.mxu0 0
        %1498 = vmatpush2.bf16.msra.mxu0 0
        %1499 = vmatprep.subr.bf16.mxu0 0
        %1500 = vmatpush2.bf16.msra.mxu0 0
        %1501 = vmatprep.subr.bf16.mxu0 0
        %1502 = vmatpush2.bf16.msra.mxu0 0
        %1503 = vmatprep.subr.bf16.mxu0 0
        %1504 = vmatpush2.bf16.msra.mxu0 0
        %1505 = vmatprep.subr.bf16.mxu0 0
        %1506 = vmatpush2.bf16.msra.mxu0 0
        %1507 = vmatprep.subr.bf16.mxu0 0
        %1508 = vmatpush2.bf16.msra.mxu0 0
        %1509 = vmatprep.mubr.bf16.mxu0 0
        %1510 = vmatmul.mubr.bf16.gmra.mxu0 %v1463
        %v1511 = vpop.f32.mrf.mxu0
        %v1512 = vadd.f32 0.0, %v1511
        %v1513 = vpop.f32.mrf.mxu0
        %v1514 = vpop.f32.mrf.mxu0
        %v1515 = vadd.f32 0.0, %v1514
        %v1516 = vpop.f32.mrf.mxu0
        %1517 = vmatprep.mubr.bf16.mxu0 0
        %1518 = vmatmul.mubr.bf16.gmra.mxu0 %v1466
        %v1519 = vpop.f32.mrf.mxu0
        %v1520 = vadd.f32 0.0, %v1519
        %v1521 = vpop.f32.mrf.mxu0
        %v1522 = vpop.f32.mrf.mxu0
        %v1523 = vadd.f32 0.0, %v1522
        %v1524 = vpop.f32.mrf.mxu0
        %1525 = vmatprep.mubr.bf16.mxu0 0
        %1526 = vmatmul.mubr.bf16.gmra.mxu0 %v1469
        %v1527 = vpop.f32.mrf.mxu0
        %v1528 = vadd.f32 0.0, %v1527
        %v1529 = vpop.f32.mrf.mxu0
        %v1530 = vpop.f32.mrf.mxu0
        %v1531 = vadd.f32 0.0, %v1530
        %v1532 = vpop.f32.mrf.mxu0
        %1533 = vmatprep.mubr.bf16.mxu0 0
        %1534 = vmatmul.mubr.bf16.gmra.mxu0 %v1472
        %v1535 = vpop.f32.mrf.mxu0
        %v1536 = vadd.f32 0.0, %v1535
        %v1537 = vpop.f32.mrf.mxu0
        %v1538 = vpop.f32.mrf.mxu0
        %v1539 = vadd.f32 0.0, %v1538
        %v1540 = vpop.f32.mrf.mxu0
        %1541 = vdwg.mxu0
        %v1542 = vadd.f32 %v1418, %v1512
        %v1543 = vadd.f32 %v1421, %v1515
        %v1544 = vadd.f32 %v1426, %v1520
        %v1545 = vadd.f32 %v1429, %v1523
        %v1546 = vadd.f32 %v1434, %v1528
        %v1547 = vadd.f32 %v1437, %v1531
        %v1548 = vadd.f32 %v1442, %v1536
        %v1549 = vadd.f32 %v1445, %v1539
        %v1550 = vld [vmem:[%s1252] sm:$0xff]
        %v1551 = vld [vmem:[%s1252 + $0x10] sm:$0xff]
        %v1552 = vld [vmem:[%s1252 + $0x20] sm:$0xff]
        %v1553 = vld [vmem:[%s1252 + $0x30] sm:$0xff]
        %v1554 = vld [vmem:[%s1252 + $0x40] sm:$0xff]
        %v1555 = vld [vmem:[%s1252 + $0x50] sm:$0xff]
        %v1556 = vld [vmem:[%s1252 + $0x60] sm:$0xff]
        %v1557 = vld [vmem:[%s1252 + $0x70] sm:$0xff]
        %v1558 = vpack.c.bf16 %v1551, %v1550
        %v1559 = vpack.c.bf16 %v1553, %v1552
        %v1560 = vpack.c.bf16 %v1555, %v1554
        %v1561 = vpack.c.bf16 %v1557, %v1556
        %s1562 = scalar_lea.vmem %s11, 12
        %v1563 = vld [vmem:[%s1562] sm:$0xf]
        %v1565 = vsel %vm1111, %v1558, 0
        %v1568 = vsel %vm1111, %v1559, 0
        %v1571 = vsel %vm1111, %v1560, 0
        %v1574 = vsel %vm1111, %v1561, 0
        %v1577 = vsel %vm1124, %v1563, 0
        %1579 = vmatprep.subr.bf16.mxu0 0
        %1580 = vmatpush1.bf16.msra.mxu0 0
        %1581 = vmatprep.subr.bf16.mxu0 0
        %1582 = vmatpush1.bf16.msra.mxu0 0
        %1583 = vmatprep.subr.bf16.mxu0 0
        %1584 = vmatpush1.bf16.msra.mxu0 0
        %1585 = vmatprep.subr.bf16.mxu0 0
        %1586 = vmatpush1.bf16.msra.mxu0 0
        %1587 = vmatprep.subr.bf16.mxu0 0
        %1588 = vmatpush1.bf16.msra.mxu0 0
        %1589 = vmatprep.subr.bf16.mxu0 0
        %1590 = vmatpush1.bf16.msra.mxu0 0
        %1591 = vmatprep.subr.bf16.mxu0 0
        %1592 = vmatpush1.bf16.msra.mxu0 0
        %1593 = vmatprep.subr.bf16.mxu0 0
        %1594 = vmatpush1.bf16.msra.mxu0 %v1577
        %1595 = vmatprep.subr.bf16.mxu0 0
        %1596 = vmatpush2.bf16.msra.mxu0 0
        %1597 = vmatprep.subr.bf16.mxu0 0
        %1598 = vmatpush2.bf16.msra.mxu0 0
        %1599 = vmatprep.subr.bf16.mxu0 0
        %1600 = vmatpush2.bf16.msra.mxu0 0
        %1601 = vmatprep.subr.bf16.mxu0 0
        %1602 = vmatpush2.bf16.msra.mxu0 0
        %1603 = vmatprep.subr.bf16.mxu0 0
        %1604 = vmatpush2.bf16.msra.mxu0 0
        %1605 = vmatprep.subr.bf16.mxu0 0
        %1606 = vmatpush2.bf16.msra.mxu0 0
        %1607 = vmatprep.subr.bf16.mxu0 0
        %1608 = vmatpush2.bf16.msra.mxu0 0
        %1609 = vmatprep.subr.bf16.mxu0 0
        %1610 = vmatpush2.bf16.msra.mxu0 0
        %1611 = vmatprep.mubr.bf16.mxu0 0
        %1612 = vmatmul.mubr.bf16.gmra.mxu0 %v1565
        %v1613 = vpop.f32.mrf.mxu0
        %v1614 = vadd.f32 0.0, %v1613
        %v1615 = vpop.f32.mrf.mxu0
        %v1616 = vpop.f32.mrf.mxu0
        %v1617 = vadd.f32 0.0, %v1616
        %v1618 = vpop.f32.mrf.mxu0
        %1619 = vmatprep.mubr.bf16.mxu0 0
        %1620 = vmatmul.mubr.bf16.gmra.mxu0 %v1568
        %v1621 = vpop.f32.mrf.mxu0
        %v1622 = vadd.f32 0.0, %v1621
        %v1623 = vpop.f32.mrf.mxu0
        %v1624 = vpop.f32.mrf.mxu0
        %v1625 = vadd.f32 0.0, %v1624
        %v1626 = vpop.f32.mrf.mxu0
        %1627 = vmatprep.mubr.bf16.mxu0 0
        %1628 = vmatmul.mubr.bf16.gmra.mxu0 %v1571
        %v1629 = vpop.f32.mrf.mxu0
        %v1630 = vadd.f32 0.0, %v1629
        %v1631 = vpop.f32.mrf.mxu0
        %v1632 = vpop.f32.mrf.mxu0
        %v1633 = vadd.f32 0.0, %v1632
        %v1634 = vpop.f32.mrf.mxu0
        %1635 = vmatprep.mubr.bf16.mxu0 0
        %1636 = vmatmul.mubr.bf16.gmra.mxu0 %v1574
        %v1637 = vpop.f32.mrf.mxu0
        %v1638 = vadd.f32 0.0, %v1637
        %v1639 = vpop.f32.mrf.mxu0
        %v1640 = vpop.f32.mrf.mxu0
        %v1641 = vadd.f32 0.0, %v1640
        %v1642 = vpop.f32.mrf.mxu0
        %1643 = vdwg.mxu0
        %v1644 = vadd.f32 %v1542, %v1614
        %v1645 = vadd.f32 %v1543, %v1617
        %v1646 = vadd.f32 %v1544, %v1622
        %v1647 = vadd.f32 %v1545, %v1625
        %v1648 = vadd.f32 %v1546, %v1630
        %v1649 = vadd.f32 %v1547, %v1633
        %v1650 = vadd.f32 %v1548, %v1638
        %v1651 = vadd.f32 %v1549, %v1641
        %v1652 = vld [vmem:[%s1252 + $0x1] sm:$0xff]
        %v1653 = vld [vmem:[%s1252 + $0x11] sm:$0xff]
        %v1654 = vld [vmem:[%s1252 + $0x21] sm:$0xff]
        %v1655 = vld [vmem:[%s1252 + $0x31] sm:$0xff]
        %v1656 = vld [vmem:[%s1252 + $0x41] sm:$0xff]
        %v1657 = vld [vmem:[%s1252 + $0x51] sm:$0xff]
        %v1658 = vld [vmem:[%s1252 + $0x61] sm:$0xff]
        %v1659 = vld [vmem:[%s1252 + $0x71] sm:$0xff]
        %v1660 = vpack.c.bf16 %v1653, %v1652
        %v1661 = vpack.c.bf16 %v1655, %v1654
        %v1662 = vpack.c.bf16 %v1657, %v1656
        %v1663 = vpack.c.bf16 %v1659, %v1658
        %s1664 = scalar_lea.vmem %s11, 16
        %v1665 = vld [vmem:[%s1664] sm:$0xf]
        %v1667 = vsel %vm1111, %v1660, 0
        %v1670 = vsel %vm1111, %v1661, 0
        %v1673 = vsel %vm1111, %v1662, 0
        %v1676 = vsel %vm1111, %v1663, 0
        %v1679 = vsel %vm1124, %v1665, 0
        %1681 = vmatprep.subr.bf16.mxu0 0
        %1682 = vmatpush1.bf16.msra.mxu0 0
        %1683 = vmatprep.subr.bf16.mxu0 0
        %1684 = vmatpush1.bf16.msra.mxu0 0
        %1685 = vmatprep.subr.bf16.mxu0 0
        %1686 = vmatpush1.bf16.msra.mxu0 0
        %1687 = vmatprep.subr.bf16.mxu0 0
        %1688 = vmatpush1.bf16.msra.mxu0 0
        %1689 = vmatprep.subr.bf16.mxu0 0
        %1690 = vmatpush1.bf16.msra.mxu0 0
        %1691 = vmatprep.subr.bf16.mxu0 0
        %1692 = vmatpush1.bf16.msra.mxu0 0
        %1693 = vmatprep.subr.bf16.mxu0 0
        %1694 = vmatpush1.bf16.msra.mxu0 0
        %1695 = vmatprep.subr.bf16.mxu0 0
        %1696 = vmatpush1.bf16.msra.mxu0 %v1679
        %1697 = vmatprep.subr.bf16.mxu0 0
        %1698 = vmatpush2.bf16.msra.mxu0 0
        %1699 = vmatprep.subr.bf16.mxu0 0
        %1700 = vmatpush2.bf16.msra.mxu0 0
        %1701 = vmatprep.subr.bf16.mxu0 0
        %1702 = vmatpush2.bf16.msra.mxu0 0
        %1703 = vmatprep.subr.bf16.mxu0 0
        %1704 = vmatpush2.bf16.msra.mxu0 0
        %1705 = vmatprep.subr.bf16.mxu0 0
        %1706 = vmatpush2.bf16.msra.mxu0 0
        %1707 = vmatprep.subr.bf16.mxu0 0
        %1708 = vmatpush2.bf16.msra.mxu0 0
        %1709 = vmatprep.subr.bf16.mxu0 0
        %1710 = vmatpush2.bf16.msra.mxu0 0
        %1711 = vmatprep.subr.bf16.mxu0 0
        %1712 = vmatpush2.bf16.msra.mxu0 0
        %1713 = vmatprep.mubr.bf16.mxu0 0
        %1714 = vmatmul.mubr.bf16.gmra.mxu0 %v1667
        %v1715 = vpop.f32.mrf.mxu0
        %v1716 = vadd.f32 0.0, %v1715
        %v1717 = vpop.f32.mrf.mxu0
        %v1718 = vpop.f32.mrf.mxu0
        %v1719 = vadd.f32 0.0, %v1718
        %v1720 = vpop.f32.mrf.mxu0
        %1721 = vmatprep.mubr.bf16.mxu0 0
        %1722 = vmatmul.mubr.bf16.gmra.mxu0 %v1670
        %v1723 = vpop.f32.mrf.mxu0
        %v1724 = vadd.f32 0.0, %v1723
        %v1725 = vpop.f32.mrf.mxu0
        %v1726 = vpop.f32.mrf.mxu0
        %v1727 = vadd.f32 0.0, %v1726
        %v1728 = vpop.f32.mrf.mxu0
        %1729 = vmatprep.mubr.bf16.mxu0 0
        %1730 = vmatmul.mubr.bf16.gmra.mxu0 %v1673
        %v1731 = vpop.f32.mrf.mxu0
        %v1732 = vadd.f32 0.0, %v1731
        %v1733 = vpop.f32.mrf.mxu0
        %v1734 = vpop.f32.mrf.mxu0
        %v1735 = vadd.f32 0.0, %v1734
        %v1736 = vpop.f32.mrf.mxu0
        %1737 = vmatprep.mubr.bf16.mxu0 0
        %1738 = vmatmul.mubr.bf16.gmra.mxu0 %v1676
        %v1739 = vpop.f32.mrf.mxu0
        %v1740 = vadd.f32 0.0, %v1739
        %v1741 = vpop.f32.mrf.mxu0
        %v1742 = vpop.f32.mrf.mxu0
        %v1743 = vadd.f32 0.0, %v1742
        %v1744 = vpop.f32.mrf.mxu0
        %1745 = vdwg.mxu0
        %v1746 = vadd.f32 %v1644, %v1716
        %v1747 = vadd.f32 %v1645, %v1719
        %v1748 = vadd.f32 %v1646, %v1724
        %v1749 = vadd.f32 %v1647, %v1727
        %v1750 = vadd.f32 %v1648, %v1732
        %v1751 = vadd.f32 %v1649, %v1735
        %v1752 = vadd.f32 %v1650, %v1740
        %v1753 = vadd.f32 %v1651, %v1743
        %v1754 = vld [vmem:[%s1252 + $0x2] sm:$0xff]
        %v1755 = vld [vmem:[%s1252 + $0x12] sm:$0xff]
        %v1756 = vld [vmem:[%s1252 + $0x22] sm:$0xff]
        %v1757 = vld [vmem:[%s1252 + $0x32] sm:$0xff]
        %v1758 = vld [vmem:[%s1252 + $0x42] sm:$0xff]
        %v1759 = vld [vmem:[%s1252 + $0x52] sm:$0xff]
        %v1760 = vld [vmem:[%s1252 + $0x62] sm:$0xff]
        %v1761 = vld [vmem:[%s1252 + $0x72] sm:$0xff]
        %v1762 = vpack.c.bf16 %v1755, %v1754
        %v1763 = vpack.c.bf16 %v1757, %v1756
        %v1764 = vpack.c.bf16 %v1759, %v1758
        %v1765 = vpack.c.bf16 %v1761, %v1760
        %s1766 = scalar_lea.vmem %s11, 20
        %v1767 = vld [vmem:[%s1766] sm:$0xf]
        %v1769 = vsel %vm1111, %v1762, 0
        %v1772 = vsel %vm1111, %v1763, 0
        %v1775 = vsel %vm1111, %v1764, 0
        %v1778 = vsel %vm1111, %v1765, 0
        %v1781 = vsel %vm1124, %v1767, 0
        %1783 = vmatprep.subr.bf16.mxu0 0
        %1784 = vmatpush1.bf16.msra.mxu0 0
        %1785 = vmatprep.subr.bf16.mxu0 0
        %1786 = vmatpush1.bf16.msra.mxu0 0
        %1787 = vmatprep.subr.bf16.mxu0 0
        %1788 = vmatpush1.bf16.msra.mxu0 0
        %1789 = vmatprep.subr.bf16.mxu0 0
        %1790 = vmatpush1.bf16.msra.mxu0 0
        %1791 = vmatprep.subr.bf16.mxu0 0
        %1792 = vmatpush1.bf16.msra.mxu0 0
        %1793 = vmatprep.subr.bf16.mxu0 0
        %1794 = vmatpush1.bf16.msra.mxu0 0
        %1795 = vmatprep.subr.bf16.mxu0 0
        %1796 = vmatpush1.bf16.msra.mxu0 0
        %1797 = vmatprep.subr.bf16.mxu0 0
        %1798 = vmatpush1.bf16.msra.mxu0 %v1781
        %1799 = vmatprep.subr.bf16.mxu0 0
        %1800 = vmatpush2.bf16.msra.mxu0 0
        %1801 = vmatprep.subr.bf16.mxu0 0
        %1802 = vmatpush2.bf16.msra.mxu0 0
        %1803 = vmatprep.subr.bf16.mxu0 0
        %1804 = vmatpush2.bf16.msra.mxu0 0
        %1805 = vmatprep.subr.bf16.mxu0 0
        %1806 = vmatpush2.bf16.msra.mxu0 0
        %1807 = vmatprep.subr.bf16.mxu0 0
        %1808 = vmatpush2.bf16.msra.mxu0 0
        %1809 = vmatprep.subr.bf16.mxu0 0
        %1810 = vmatpush2.bf16.msra.mxu0 0
        %1811 = vmatprep.subr.bf16.mxu0 0
        %1812 = vmatpush2.bf16.msra.mxu0 0
        %1813 = vmatprep.subr.bf16.mxu0 0
        %1814 = vmatpush2.bf16.msra.mxu0 0
        %1815 = vmatprep.mubr.bf16.mxu0 0
        %1816 = vmatmul.mubr.bf16.gmra.mxu0 %v1769
        %v1817 = vpop.f32.mrf.mxu0
        %v1818 = vadd.f32 0.0, %v1817
        %v1819 = vpop.f32.mrf.mxu0
        %v1820 = vpop.f32.mrf.mxu0
        %v1821 = vadd.f32 0.0, %v1820
        %v1822 = vpop.f32.mrf.mxu0
        %1823 = vmatprep.mubr.bf16.mxu0 0
        %1824 = vmatmul.mubr.bf16.gmra.mxu0 %v1772
        %v1825 = vpop.f32.mrf.mxu0
        %v1826 = vadd.f32 0.0, %v1825
        %v1827 = vpop.f32.mrf.mxu0
        %v1828 = vpop.f32.mrf.mxu0
        %v1829 = vadd.f32 0.0, %v1828
        %v1830 = vpop.f32.mrf.mxu0
        %1831 = vmatprep.mubr.bf16.mxu0 0
        %1832 = vmatmul.mubr.bf16.gmra.mxu0 %v1775
        %v1833 = vpop.f32.mrf.mxu0
        %v1834 = vadd.f32 0.0, %v1833
        %v1835 = vpop.f32.mrf.mxu0
        %v1836 = vpop.f32.mrf.mxu0
        %v1837 = vadd.f32 0.0, %v1836
        %v1838 = vpop.f32.mrf.mxu0
        %1839 = vmatprep.mubr.bf16.mxu0 0
        %1840 = vmatmul.mubr.bf16.gmra.mxu0 %v1778
        %v1841 = vpop.f32.mrf.mxu0
        %v1842 = vadd.f32 0.0, %v1841
        %v1843 = vpop.f32.mrf.mxu0
        %v1844 = vpop.f32.mrf.mxu0
        %v1845 = vadd.f32 0.0, %v1844
        %v1846 = vpop.f32.mrf.mxu0
        %1847 = vdwg.mxu0
        %v1848 = vadd.f32 %v1746, %v1818
        %v1849 = vadd.f32 %v1747, %v1821
        %v1850 = vadd.f32 %v1748, %v1826
        %v1851 = vadd.f32 %v1749, %v1829
        %v1852 = vadd.f32 %v1750, %v1834
        %v1853 = vadd.f32 %v1751, %v1837
        %v1854 = vadd.f32 %v1752, %v1842
        %v1855 = vadd.f32 %v1753, %v1845
        %s1856 = scalar_lea.vmem [#allocation3], 32
        %v1857 = vld [vmem:[%s1856] sm:$0xff]
        %v1858 = vld [vmem:[%s1856 + $0x10] sm:$0xff]
        %v1859 = vld [vmem:[%s1856 + $0x20] sm:$0xff]
        %v1860 = vld [vmem:[%s1856 + $0x30] sm:$0xff]
        %v1861 = vld [vmem:[%s1856 + $0x40] sm:$0xff]
        %v1862 = vld [vmem:[%s1856 + $0x50] sm:$0xff]
        %v1863 = vld [vmem:[%s1856 + $0x60] sm:$0xff]
        %v1864 = vld [vmem:[%s1856 + $0x70] sm:$0xff]
        %v1865 = vpack.c.bf16 %v1858, %v1857
        %v1866 = vpack.c.bf16 %v1860, %v1859
        %v1867 = vpack.c.bf16 %v1862, %v1861
        %v1868 = vpack.c.bf16 %v1864, %v1863
        %s1869 = scalar_lea.vmem %s11, 24
        %v1870 = vld [vmem:[%s1869] sm:$0xf]
        %v1872 = vsel %vm1111, %v1865, 0
        %v1875 = vsel %vm1111, %v1866, 0
        %v1878 = vsel %vm1111, %v1867, 0
        %v1881 = vsel %vm1111, %v1868, 0
        %v1884 = vsel %vm1124, %v1870, 0
        %1886 = vmatprep.subr.bf16.mxu0 0
        %1887 = vmatpush1.bf16.msra.mxu0 0
        %1888 = vmatprep.subr.bf16.mxu0 0
        %1889 = vmatpush1.bf16.msra.mxu0 0
        %1890 = vmatprep.subr.bf16.mxu0 0
        %1891 = vmatpush1.bf16.msra.mxu0 0
        %1892 = vmatprep.subr.bf16.mxu0 0
        %1893 = vmatpush1.bf16.msra.mxu0 0
        %1894 = vmatprep.subr.bf16.mxu0 0
        %1895 = vmatpush1.bf16.msra.mxu0 0
        %1896 = vmatprep.subr.bf16.mxu0 0
        %1897 = vmatpush1.bf16.msra.mxu0 0
        %1898 = vmatprep.subr.bf16.mxu0 0
        %1899 = vmatpush1.bf16.msra.mxu0 0
        %1900 = vmatprep.subr.bf16.mxu0 0
        %1901 = vmatpush1.bf16.msra.mxu0 %v1884
        %1902 = vmatprep.subr.bf16.mxu0 0
        %1903 = vmatpush2.bf16.msra.mxu0 0
        %1904 = vmatprep.subr.bf16.mxu0 0
        %1905 = vmatpush2.bf16.msra.mxu0 0
        %1906 = vmatprep.subr.bf16.mxu0 0
        %1907 = vmatpush2.bf16.msra.mxu0 0
        %1908 = vmatprep.subr.bf16.mxu0 0
        %1909 = vmatpush2.bf16.msra.mxu0 0
        %1910 = vmatprep.subr.bf16.mxu0 0
        %1911 = vmatpush2.bf16.msra.mxu0 0
        %1912 = vmatprep.subr.bf16.mxu0 0
        %1913 = vmatpush2.bf16.msra.mxu0 0
        %1914 = vmatprep.subr.bf16.mxu0 0
        %1915 = vmatpush2.bf16.msra.mxu0 0
        %1916 = vmatprep.subr.bf16.mxu0 0
        %1917 = vmatpush2.bf16.msra.mxu0 0
        %1918 = vmatprep.mubr.bf16.mxu0 0
        %1919 = vmatmul.mubr.bf16.gmra.mxu0 %v1872
        %v1920 = vpop.f32.mrf.mxu0
        %v1921 = vadd.f32 0.0, %v1920
        %v1922 = vpop.f32.mrf.mxu0
        %v1923 = vpop.f32.mrf.mxu0
        %v1924 = vadd.f32 0.0, %v1923
        %v1925 = vpop.f32.mrf.mxu0
        %1926 = vmatprep.mubr.bf16.mxu0 0
        %1927 = vmatmul.mubr.bf16.gmra.mxu0 %v1875
        %v1928 = vpop.f32.mrf.mxu0
        %v1929 = vadd.f32 0.0, %v1928
        %v1930 = vpop.f32.mrf.mxu0
        %v1931 = vpop.f32.mrf.mxu0
        %v1932 = vadd.f32 0.0, %v1931
        %v1933 = vpop.f32.mrf.mxu0
        %1934 = vmatprep.mubr.bf16.mxu0 0
        %1935 = vmatmul.mubr.bf16.gmra.mxu0 %v1878
        %v1936 = vpop.f32.mrf.mxu0
        %v1937 = vadd.f32 0.0, %v1936
        %v1938 = vpop.f32.mrf.mxu0
        %v1939 = vpop.f32.mrf.mxu0
        %v1940 = vadd.f32 0.0, %v1939
        %v1941 = vpop.f32.mrf.mxu0
        %1942 = vmatprep.mubr.bf16.mxu0 0
        %1943 = vmatmul.mubr.bf16.gmra.mxu0 %v1881
        %v1944 = vpop.f32.mrf.mxu0
        %v1945 = vadd.f32 0.0, %v1944
        %v1946 = vpop.f32.mrf.mxu0
        %v1947 = vpop.f32.mrf.mxu0
        %v1948 = vadd.f32 0.0, %v1947
        %v1949 = vpop.f32.mrf.mxu0
        %1950 = vdwg.mxu0
        %v1951 = vadd.f32 %v1848, %v1921
        %v1952 = vadd.f32 %v1849, %v1924
        %v1953 = vadd.f32 %v1850, %v1929
        %v1954 = vadd.f32 %v1851, %v1932
        %v1955 = vadd.f32 %v1852, %v1937
        %v1956 = vadd.f32 %v1853, %v1940
        %v1957 = vadd.f32 %v1854, %v1945
        %v1958 = vadd.f32 %v1855, %v1948
        %v1959 = vld [vmem:[%s1856 + $0x1] sm:$0xff]
        %v1960 = vld [vmem:[%s1856 + $0x11] sm:$0xff]
        %v1961 = vld [vmem:[%s1856 + $0x21] sm:$0xff]
        %v1962 = vld [vmem:[%s1856 + $0x31] sm:$0xff]
        %v1963 = vld [vmem:[%s1856 + $0x41] sm:$0xff]
        %v1964 = vld [vmem:[%s1856 + $0x51] sm:$0xff]
        %v1965 = vld [vmem:[%s1856 + $0x61] sm:$0xff]
        %v1966 = vld [vmem:[%s1856 + $0x71] sm:$0xff]
        %v1967 = vpack.c.bf16 %v1960, %v1959
        %v1968 = vpack.c.bf16 %v1962, %v1961
        %v1969 = vpack.c.bf16 %v1964, %v1963
        %v1970 = vpack.c.bf16 %v1966, %v1965
        %s1971 = scalar_lea.vmem %s11, 28
        %v1972 = vld [vmem:[%s1971] sm:$0xf]
        %v1974 = vsel %vm1111, %v1967, 0
        %v1977 = vsel %vm1111, %v1968, 0
        %v1980 = vsel %vm1111, %v1969, 0
        %v1983 = vsel %vm1111, %v1970, 0
        %v1986 = vsel %vm1124, %v1972, 0
        %1988 = vmatprep.subr.bf16.mxu0 0
        %1989 = vmatpush1.bf16.msra.mxu0 0
        %1990 = vmatprep.subr.bf16.mxu0 0
        %1991 = vmatpush1.bf16.msra.mxu0 0
        %1992 = vmatprep.subr.bf16.mxu0 0
        %1993 = vmatpush1.bf16.msra.mxu0 0
        %1994 = vmatprep.subr.bf16.mxu0 0
        %1995 = vmatpush1.bf16.msra.mxu0 0
        %1996 = vmatprep.subr.bf16.mxu0 0
        %1997 = vmatpush1.bf16.msra.mxu0 0
        %1998 = vmatprep.subr.bf16.mxu0 0
        %1999 = vmatpush1.bf16.msra.mxu0 0
        %2000 = vmatprep.subr.bf16.mxu0 0
        %2001 = vmatpush1.bf16.msra.mxu0 0
        %2002 = vmatprep.subr.bf16.mxu0 0
        %2003 = vmatpush1.bf16.msra.mxu0 %v1986
        %2004 = vmatprep.subr.bf16.mxu0 0
        %2005 = vmatpush2.bf16.msra.mxu0 0
        %2006 = vmatprep.subr.bf16.mxu0 0
        %2007 = vmatpush2.bf16.msra.mxu0 0
        %2008 = vmatprep.subr.bf16.mxu0 0
        %2009 = vmatpush2.bf16.msra.mxu0 0
        %2010 = vmatprep.subr.bf16.mxu0 0
        %2011 = vmatpush2.bf16.msra.mxu0 0
        %2012 = vmatprep.subr.bf16.mxu0 0
        %2013 = vmatpush2.bf16.msra.mxu0 0
        %2014 = vmatprep.subr.bf16.mxu0 0
        %2015 = vmatpush2.bf16.msra.mxu0 0
        %2016 = vmatprep.subr.bf16.mxu0 0
        %2017 = vmatpush2.bf16.msra.mxu0 0
        %2018 = vmatprep.subr.bf16.mxu0 0
        %2019 = vmatpush2.bf16.msra.mxu0 0
        %2020 = vmatprep.mubr.bf16.mxu0 0
        %2021 = vmatmul.mubr.bf16.gmra.mxu0 %v1974
        %v2022 = vpop.f32.mrf.mxu0
        %v2023 = vadd.f32 0.0, %v2022
        %v2024 = vpop.f32.mrf.mxu0
        %v2025 = vpop.f32.mrf.mxu0
        %v2026 = vadd.f32 0.0, %v2025
        %v2027 = vpop.f32.mrf.mxu0
        %2028 = vmatprep.mubr.bf16.mxu0 0
        %2029 = vmatmul.mubr.bf16.gmra.mxu0 %v1977
        %v2030 = vpop.f32.mrf.mxu0
        %v2031 = vadd.f32 0.0, %v2030
        %v2032 = vpop.f32.mrf.mxu0
        %v2033 = vpop.f32.mrf.mxu0
        %v2034 = vadd.f32 0.0, %v2033
        %v2035 = vpop.f32.mrf.mxu0
        %2036 = vmatprep.mubr.bf16.mxu0 0
        %2037 = vmatmul.mubr.bf16.gmra.mxu0 %v1980
        %v2038 = vpop.f32.mrf.mxu0
        %v2039 = vadd.f32 0.0, %v2038
        %v2040 = vpop.f32.mrf.mxu0
        %v2041 = vpop.f32.mrf.mxu0
        %v2042 = vadd.f32 0.0, %v2041
        %v2043 = vpop.f32.mrf.mxu0
        %2044 = vmatprep.mubr.bf16.mxu0 0
        %2045 = vmatmul.mubr.bf16.gmra.mxu0 %v1983
        %v2046 = vpop.f32.mrf.mxu0
        %v2047 = vadd.f32 0.0, %v2046
        %v2048 = vpop.f32.mrf.mxu0
        %v2049 = vpop.f32.mrf.mxu0
        %v2050 = vadd.f32 0.0, %v2049
        %v2051 = vpop.f32.mrf.mxu0
        %2052 = vdwg.mxu0
        %v2053 = vadd.f32 %v1951, %v2023
        %v2054 = vadd.f32 %v1952, %v2026
        %v2055 = vadd.f32 %v1953, %v2031
        %v2056 = vadd.f32 %v1954, %v2034
        %v2057 = vadd.f32 %v1955, %v2039
        %v2058 = vadd.f32 %v1956, %v2042
        %v2059 = vadd.f32 %v1957, %v2047
        %v2060 = vadd.f32 %v1958, %v2050
        %v2061 = vld [vmem:[%s1856 + $0x2] sm:$0xff]
        %v2062 = vld [vmem:[%s1856 + $0x12] sm:$0xff]
        %v2063 = vld [vmem:[%s1856 + $0x22] sm:$0xff]
        %v2064 = vld [vmem:[%s1856 + $0x32] sm:$0xff]
        %v2065 = vld [vmem:[%s1856 + $0x42] sm:$0xff]
        %v2066 = vld [vmem:[%s1856 + $0x52] sm:$0xff]
        %v2067 = vld [vmem:[%s1856 + $0x62] sm:$0xff]
        %v2068 = vld [vmem:[%s1856 + $0x72] sm:$0xff]
        %v2069 = vpack.c.bf16 %v2062, %v2061
        %v2070 = vpack.c.bf16 %v2064, %v2063
        %v2071 = vpack.c.bf16 %v2066, %v2065
        %v2072 = vpack.c.bf16 %v2068, %v2067
        %s2073 = scalar_lea.vmem %s11, 32
        %v2074 = vld [vmem:[%s2073] sm:$0xf]
        %v2076 = vsel %vm1111, %v2069, 0
        %v2079 = vsel %vm1111, %v2070, 0
        %v2082 = vsel %vm1111, %v2071, 0
        %v2085 = vsel %vm1111, %v2072, 0
        %v2088 = vsel %vm1124, %v2074, 0
        %2090 = vmatprep.subr.bf16.mxu0 0
        %2091 = vmatpush1.bf16.msra.mxu0 0
        %2092 = vmatprep.subr.bf16.mxu0 0
        %2093 = vmatpush1.bf16.msra.mxu0 0
        %2094 = vmatprep.subr.bf16.mxu0 0
        %2095 = vmatpush1.bf16.msra.mxu0 0
        %2096 = vmatprep.subr.bf16.mxu0 0
        %2097 = vmatpush1.bf16.msra.mxu0 0
        %2098 = vmatprep.subr.bf16.mxu0 0
        %2099 = vmatpush1.bf16.msra.mxu0 0
        %2100 = vmatprep.subr.bf16.mxu0 0
        %2101 = vmatpush1.bf16.msra.mxu0 0
        %2102 = vmatprep.subr.bf16.mxu0 0
        %2103 = vmatpush1.bf16.msra.mxu0 0
        %2104 = vmatprep.subr.bf16.mxu0 0
        %2105 = vmatpush1.bf16.msra.mxu0 %v2088
        %2106 = vmatprep.subr.bf16.mxu0 0
        %2107 = vmatpush2.bf16.msra.mxu0 0
        %2108 = vmatprep.subr.bf16.mxu0 0
        %2109 = vmatpush2.bf16.msra.mxu0 0
        %2110 = vmatprep.subr.bf16.mxu0 0
        %2111 = vmatpush2.bf16.msra.mxu0 0
        %2112 = vmatprep.subr.bf16.mxu0 0
        %2113 = vmatpush2.bf16.msra.mxu0 0
        %2114 = vmatprep.subr.bf16.mxu0 0
        %2115 = vmatpush2.bf16.msra.mxu0 0
        %2116 = vmatprep.subr.bf16.mxu0 0
        %2117 = vmatpush2.bf16.msra.mxu0 0
        %2118 = vmatprep.subr.bf16.mxu0 0
        %2119 = vmatpush2.bf16.msra.mxu0 0
        %2120 = vmatprep.subr.bf16.mxu0 0
        %2121 = vmatpush2.bf16.msra.mxu0 0
        %2122 = vmatprep.mubr.bf16.mxu0 0
        %2123 = vmatmul.mubr.bf16.gmra.mxu0 %v2076
        %v2124 = vpop.f32.mrf.mxu0
        %v2125 = vadd.f32 0.0, %v2124
        %v2126 = vpop.f32.mrf.mxu0
        %v2127 = vpop.f32.mrf.mxu0
        %v2128 = vadd.f32 0.0, %v2127
        %v2129 = vpop.f32.mrf.mxu0
        %2130 = vmatprep.mubr.bf16.mxu0 0
        %2131 = vmatmul.mubr.bf16.gmra.mxu0 %v2079
        %v2132 = vpop.f32.mrf.mxu0
        %v2133 = vadd.f32 0.0, %v2132
        %v2134 = vpop.f32.mrf.mxu0
        %v2135 = vpop.f32.mrf.mxu0
        %v2136 = vadd.f32 0.0, %v2135
        %v2137 = vpop.f32.mrf.mxu0
        %2138 = vmatprep.mubr.bf16.mxu0 0
        %2139 = vmatmul.mubr.bf16.gmra.mxu0 %v2082
        %v2140 = vpop.f32.mrf.mxu0
        %v2141 = vadd.f32 0.0, %v2140
        %v2142 = vpop.f32.mrf.mxu0
        %v2143 = vpop.f32.mrf.mxu0
        %v2144 = vadd.f32 0.0, %v2143
        %v2145 = vpop.f32.mrf.mxu0
        %2146 = vmatprep.mubr.bf16.mxu0 0
        %2147 = vmatmul.mubr.bf16.gmra.mxu0 %v2085
        %v2148 = vpop.f32.mrf.mxu0
        %v2149 = vadd.f32 0.0, %v2148
        %v2150 = vpop.f32.mrf.mxu0
        %v2151 = vpop.f32.mrf.mxu0
        %v2152 = vadd.f32 0.0, %v2151
        %v2153 = vpop.f32.mrf.mxu0
        %2154 = vdwg.mxu0
        %v2155 = vadd.f32 %v2053, %v2125
        %v2156 = vadd.f32 %v2054, %v2128
        %v2157 = vadd.f32 %v2055, %v2133
        %v2158 = vadd.f32 %v2056, %v2136
        %v2159 = vadd.f32 %v2057, %v2141
        %v2160 = vadd.f32 %v2058, %v2144
        %v2161 = vadd.f32 %v2059, %v2149
        %v2162 = vadd.f32 %v2060, %v2152
        %v2163 = vld [vmem:[%s12] sm:$0x1]
        %v2165 = vlaneseq
        %v2166 = vshrl.u32 %v2165, 7
        %v2167 = vsub.s32 0, %v2166
        %v2168 = vrot.slane %v2163, %v2167
        %v2170 = vmul.f32 %v2155, %v2168
        %v2171 = vmul.f32 %v2156, %v2168
        %v2172 = vmul.f32 %v2157, %v2168
        %v2173 = vmul.f32 %v2158, %v2168
        %v2174 = vmul.f32 %v2159, %v2168
        %v2175 = vmul.f32 %v2160, %v2168
        %v2176 = vmul.f32 %v2161, %v2168
        %v2177 = vmul.f32 %v2162, %v2168
        %v2178 = vld [vmem:[%s13] sm:$0x1]
        %v2180 = vlaneseq
        %v2181 = vshrl.u32 %v2180, 7
        %v2182 = vsub.s32 0, %v2181
        %v2183 = vrot.slane %v2178, %v2182
        %v2185 = vadd.f32 %v2170, %v2183
        %v2186 = vadd.f32 %v2171, %v2183
        %v2187 = vadd.f32 %v2172, %v2183
        %v2188 = vadd.f32 %v2173, %v2183
        %v2189 = vadd.f32 %v2174, %v2183
        %v2190 = vadd.f32 %v2175, %v2183
        %v2191 = vadd.f32 %v2176, %v2183
        %v2192 = vadd.f32 %v2177, %v2183
        %v2193 = vmax.f32 %v2185, 0.0
        %v2194 = vmax.f32 %v2186, 0.0
        %v2195 = vmax.f32 %v2187, 0.0
        %v2196 = vmax.f32 %v2188, 0.0
        %v2197 = vmax.f32 %v2189, 0.0
        %v2198 = vmax.f32 %v2190, 0.0
        %v2199 = vmax.f32 %v2191, 0.0
        %v2200 = vmax.f32 %v2192, 0.0
        %v2201 = vld [vmem:[%s485] sm:$0xff]
        %v2202 = vld [vmem:[%s485 + $0x8] sm:$0xff]
        %v2203 = vld [vmem:[%s485 + $0x10] sm:$0xff]
        %v2204 = vld [vmem:[%s485 + $0x18] sm:$0xff]
        %v2205 = vld [vmem:[%s485 + $0x20] sm:$0xff]
        %v2206 = vld [vmem:[%s485 + $0x28] sm:$0xff]
        %v2207 = vld [vmem:[%s485 + $0x30] sm:$0xff]
        %v2208 = vld [vmem:[%s485 + $0x38] sm:$0xff]
        %2217 = vrot.lane.b32.xlu0 %v1090, 8
        %v2218 = vpop.permute.xlu0 %2217
        %2219 = vrot.lane.b32.xlu0 %v1091, 8
        %v2220 = vpop.permute.xlu0 %2219
        %2221 = vrot.lane.b32.xlu0 %v1092, 8
        %v2222 = vpop.permute.xlu0 %2221
        %2223 = vrot.lane.b32.xlu0 %v1093, 8
        %v2224 = vpop.permute.xlu0 %2223
        %2225 = vrot.lane.b32.xlu0 %v1094, 8
        %v2226 = vpop.permute.xlu0 %2225
        %2227 = vrot.lane.b32.xlu0 %v1095, 8
        %v2228 = vpop.permute.xlu0 %2227
        %2229 = vrot.lane.b32.xlu0 %v1096, 8
        %v2230 = vpop.permute.xlu0 %2229
        %2231 = vrot.lane.b32.xlu0 %v1097, 8
        %v2232 = vpop.permute.xlu0 %2231
        %2249 = vrot.lane.b32.xlu0 %v2193, 12
        %v2250 = vpop.permute.xlu0 %2249
        %2251 = vrot.lane.b32.xlu0 %v2194, 12
        %v2252 = vpop.permute.xlu0 %2251
        %2253 = vrot.lane.b32.xlu0 %v2195, 12
        %v2254 = vpop.permute.xlu0 %2253
        %2255 = vrot.lane.b32.xlu0 %v2196, 12
        %v2256 = vpop.permute.xlu0 %2255
        %2257 = vrot.lane.b32.xlu0 %v2197, 12
        %v2258 = vpop.permute.xlu0 %2257
        %2259 = vrot.lane.b32.xlu0 %v2198, 12
        %v2260 = vpop.permute.xlu0 %2259
        %2261 = vrot.lane.b32.xlu0 %v2199, 12
        %v2262 = vpop.permute.xlu0 %2261
        %2263 = vrot.lane.b32.xlu0 %v2200, 12
        %v2264 = vpop.permute.xlu0 %2263
        %v2273 = vsel %vm1111, %v2201, %v2218
        %v2274 = vsel %vm1111, %v2202, %v2220
        %v2275 = vsel %vm1111, %v2203, %v2222
        %v2276 = vsel %vm1111, %v2204, %v2224
        %v2277 = vsel %vm1111, %v2205, %v2226
        %v2278 = vsel %vm1111, %v2206, %v2228
        %v2279 = vsel %vm1111, %v2207, %v2230
        %v2280 = vsel %vm1111, %v2208, %v2232
        %vm2281 = vcmask 97280
        %v2282 = vsel %vm2281, %v2273, %v2250
        %v2283 = vsel %vm2281, %v2274, %v2252
        %v2284 = vsel %vm2281, %v2275, %v2254
        %v2285 = vsel %vm2281, %v2276, %v2256
        %v2286 = vsel %vm2281, %v2277, %v2258
        %v2287 = vsel %vm2281, %v2278, %v2260
        %v2288 = vsel %vm2281, %v2279, %v2262
        %v2289 = vsel %vm2281, %v2280, %v2264
        %2290 = vst.msk [vmem:[%s475] sm:$0xff] %vm507, %v2282
        %2291 = vst.msk [vmem:[%s475 + $0x8] sm:$0xff] %vm507, %v2283
        %2292 = vst.msk [vmem:[%s475 + $0x10] sm:$0xff] %vm507, %v2284
        %2293 = vst.msk [vmem:[%s475 + $0x18] sm:$0xff] %vm507, %v2285
        %2294 = vst.msk [vmem:[%s475 + $0x20] sm:$0xff] %vm507, %v2286
        %2295 = vst.msk [vmem:[%s475 + $0x28] sm:$0xff] %vm507, %v2287
        %2296 = vst.msk [vmem:[%s475 + $0x30] sm:$0xff] %vm507, %v2288
        %2297 = vst.msk [vmem:[%s475 + $0x38] sm:$0xff] %vm507, %v2289
        %s2298 = sand.u32 %s340, 1
        %s2299 = scalar_lea.sflag [#allocation5], %s2298
        %s2300 = sand.u32 %s340, 1
        %s2301 = smul.addr %s2300, 64
        %s2302 = scalar_lea.vmem [#allocation4], %s2301
        // Predicated region
        $region77: #{conv_down_normal_forward_nhwc.1} parent=75 // pred_check
          %p2303 = pneg %p350
        $region78: #{conv_down_normal_forward_nhwc.1} parent=75 // pred_check_branch
          %2305 = sbr.rel (%p2303) target = $region80
        $region79: #{conv_down_normal_forward_nhwc.1} parent=75 // pred_region
          %s2307 = ssub.s32 1024, 1024
          %2308 = vsyncadd %s2299, %s2307
          %s2309 = smul.addr %s28, 8
          %s2310 = smul.addr %s2309, 128
          %s2311 = scalar_lea.hbm %s14, %s2310
          %s2312 = sshll.u32 %s2302, 4
          %s2313 = int_to_ptr.vmem [resolvable:$true] %s2312
          %2318 = dma.vmem_to_hbm [thread:$0]  %s2313, 1024, %s2311, %s2299, 128, 128, 8
        $region80: #{conv_down_normal_forward_nhwc.1} parent=75 // pred_fallthru
          _
      $region76: #{conv_down_normal_forward_nhwc.1} parent=5 // pred_fallthru
        _
      %p2319 = scmp.le.s32.totalorder 2, %s23
      // Predicated region
      $region81: #{conv_down_normal_forward_nhwc.1} parent=5 // pred_check
        %p2320 = pneg %p2319
      $region82: #{conv_down_normal_forward_nhwc.1} parent=5 // pred_check_branch
        %2322 = sbr.rel (%p2320) target = $region84
      $region83: #{conv_down_normal_forward_nhwc.1} parent=5 // pred_region
        %s2323 = ssub.s32 %s23, 2
        // Predicated region
        $region85: #{conv_down_normal_forward_nhwc.1} parent=83 // pred_check
          %p2324 = pneg %p356
        $region86: #{conv_down_normal_forward_nhwc.1} parent=83 // pred_check_branch
          %2326 = sbr.rel (%p2324) target = $region88
        $region87: #{conv_down_normal_forward_nhwc.1} parent=83 // pred_region
          %s2327 = sand.u32 %s341, 1
          %s2328 = scalar_lea.sflag [#allocation5], %s2327
          %s2329 = sand.u32 %s341, 1
          %s2330 = smul.addr %s2329, 64
          %s2331 = scalar_lea.vmem [#allocation4], %s2330
          %2332 = dma.done %s2328, 1024
        $region88: #{conv_down_normal_forward_nhwc.1} parent=83 // pred_fallthru
          _
      $region84: #{conv_down_normal_forward_nhwc.1} parent=5 // pred_fallthru
        _
    $region6: #{conv_down_normal_forward_nhwc.1} parent=1 // loop_footer
      %s27 = sadd.s32 1, %s23
    $region7: #{conv_down_normal_forward_nhwc.1} parent=1 // loop_footer_branch
      %22 = sbr.rel target = $region3
    $region8: #{conv_down_normal_forward_nhwc.1} parent=1 // loop_exit
      _
    %2333 = vsyncpa [#allocation5], 1
    %s2334 = scalar_lea.sflag [#allocation5], 1
    %2335 = vsyncpa %s2334, 1

</llo_original>
